<compile_context>
chip_gen: v7x
topology: tpu7x:2x2x1
jax: 0.10.0
libtpu: 0.0.40
codegen_flags: <defaults>
</compile_context>

<pallas_src>
import functools

import jax
import jax.numpy as jnp
from jax.experimental import pallas as pl
from jax.experimental.pallas import tpu as pltpu

LANE = 128
NEG_INF = -1e30


def _prenorm_attn_kernel(xq_ref, xkv_ref, g_ref, b_ref,
                         wq_ref, wk_ref, wv_ref, wo_ref, bo_ref,
                         o_ref,
                         q_scr, m_scr, l_scr, acc_scr,
                         *, scale, eps, causal, tq, tk, matmul_dtype):
    ki = pl.program_id(2)
    nk = pl.num_programs(2)

    def layernorm(x):
        x = x.astype(jnp.float32)
        mu = jnp.mean(x, axis=-1, keepdims=True)
        var = jnp.mean((x - mu) ** 2, axis=-1, keepdims=True)
        xn = (x - mu) * jax.lax.rsqrt(var + eps)
        return xn * g_ref[...].astype(jnp.float32) + b_ref[...].astype(jnp.float32)

    @pl.when(ki == 0)
    def _init():
        xn_q = layernorm(xq_ref[...])
        q = jnp.dot(xn_q.astype(matmul_dtype),
                    wq_ref[...].astype(matmul_dtype),
                    preferred_element_type=jnp.float32)
        q_scr[...] = q * scale                       # fold softmax scale into q
        m_scr[...] = jnp.full(m_scr.shape, NEG_INF, dtype=jnp.float32)
        l_scr[...] = jnp.zeros(l_scr.shape, dtype=jnp.float32)
        acc_scr[...] = jnp.zeros(acc_scr.shape, dtype=jnp.float32)

    def _compute():
        xn_kv = layernorm(xkv_ref[...])
        xn_kv_c = xn_kv.astype(matmul_dtype)
        k = jnp.dot(xn_kv_c, wk_ref[...].astype(matmul_dtype),
                    preferred_element_type=jnp.float32)
        v = jnp.dot(xn_kv_c, wv_ref[...].astype(matmul_dtype),
                    preferred_element_type=jnp.float32)

        # scores: contract last dims directly (no XLU transpose of k)
        s = jax.lax.dot_general(
            q_scr[...].astype(matmul_dtype), k.astype(matmul_dtype),
            dimension_numbers=(((1,), (1,)), ((), ())),
            preferred_element_type=jnp.float32)       # (tq, tk)

        if causal:
            q_start = pl.program_id(1) * tq
            k_start = ki * tk
            row = q_start + jax.lax.broadcasted_iota(jnp.int32, s.shape, 0)
            col = k_start + jax.lax.broadcasted_iota(jnp.int32, s.shape, 1)
            s = jnp.where(col > row, NEG_INF, s)

        # online softmax update (keep elementwise math in f32; v5e-safe)
        m_new = jnp.maximum(m_scr[...], jnp.max(s, axis=-1, keepdims=True))
        alpha = jnp.exp(m_scr[...] - m_new)
        p = jnp.exp(s - m_new)
        l_scr[...] = alpha * l_scr[...] + jnp.sum(p, axis=-1, keepdims=True)
        acc_scr[...] = alpha * acc_scr[...] + jnp.dot(
            p.astype(matmul_dtype), v.astype(matmul_dtype),
            preferred_element_type=jnp.float32)
        m_scr[...] = m_new

    if causal:
        # skip kv tiles that lie entirely above the diagonal
        q_start = pl.program_id(1) * tq
        k_start = ki * tk
        pl.when(k_start <= q_start + (tq - 1))(_compute)
    else:
        _compute()

    @pl.when(ki == nk - 1)
    def _finalize():
        out = acc_scr[...] * pl.reciprocal(l_scr[...], approx=True)
        y = jnp.dot(out.astype(matmul_dtype),
                    wo_ref[...].astype(matmul_dtype),
                    preferred_element_type=jnp.float32)
        y = y + bo_ref[...].astype(jnp.float32)
        o_ref[...] = y.astype(o_ref.dtype)


def _pad_axis(a, axis, mult):
    pad = (-a.shape[axis]) % mult
    if pad == 0:
        return a
    widths = [(0, 0)] * a.ndim
    widths[axis] = (0, pad)
    return jnp.pad(a, widths)


def prenorm_attention_pallas(x, gamma, beta, w_qkv, w_out, b_out, *,
                             scale, eps=1e-5, causal=False,
                             tq=None, tk=None, matmul_dtype=jnp.float32):
    """PreNorm(LayerNorm) + single-head attention, fused.

    x: (B, N, dim_in); gamma/beta: (dim_in,);
    w_qkv: (dim_in, 3*dim_inner) pre-transposed (in, out);
    w_out: (dim_inner, dim_out); b_out: (dim_out,)."""
    B, N, dim_in = x.shape
    dim_inner = w_qkv.shape[1] // 3
    dim_out = w_out.shape[1]

    if tq is None:
        tq = min(N, 128)
    if tk is None:
        tk = min(N, 128)
    assert N % tq == 0 and N % tk == 0, "tile sizes must divide sequence length"

    # Split fused qkv into three lane-aligned projections; zero-pad feature
    # dims to multiples of 128 (padding is mathematically inert).
    wq = w_qkv[:, 0 * dim_inner:1 * dim_inner]
    wk = w_qkv[:, 1 * dim_inner:2 * dim_inner]
    wv = w_qkv[:, 2 * dim_inner:3 * dim_inner]
    wq_p = _pad_axis(wq, 1, LANE)
    wk_p = _pad_axis(wk, 1, LANE)
    wv_p = _pad_axis(wv, 1, LANE)
    w_out_p = _pad_axis(_pad_axis(w_out, 0, LANE), 1, LANE)
    b_out_p = _pad_axis(b_out.reshape(1, dim_out), 1, LANE)
    dp = wq_p.shape[1]
    dout_p = w_out_p.shape[1]

    gamma2 = gamma.reshape(1, dim_in)
    beta2 = beta.reshape(1, dim_in)

    kernel = functools.partial(
        _prenorm_attn_kernel,
        scale=scale, eps=eps, causal=causal, tq=tq, tk=tk,
        matmul_dtype=matmul_dtype)

    flops = (2 * B * N * dim_in * 3 * dp
             + 2 * B * N * N * dp * 2
             + 2 * B * N * dp * dout_p)
    bytes_accessed = 4 * (x.size + 3 * wq_p.size + w_out_p.size
                          + b_out_p.size + B * N * dout_p)
    cost = pl.CostEstimate(flops=flops, transcendentals=B * N * N,
                           bytes_accessed=bytes_accessed)

    y_padded = pl.pallas_call(
        kernel,
        out_shape=jax.ShapeDtypeStruct((B, N, dout_p), x.dtype),
        grid_spec=pltpu.PrefetchScalarGridSpec(
            num_scalar_prefetch=0,
            grid=(B, N // tq, N // tk),
            in_specs=[
                pl.BlockSpec((pl.Squeezed(), tq, dim_in),
                             lambda b, qi, ki: (b, qi, 0)),        # x (q tile)
                pl.BlockSpec((pl.Squeezed(), tk, dim_in),
                             lambda b, qi, ki: (b, ki, 0)),        # x (kv tile)
                pl.BlockSpec((1, dim_in), lambda b, qi, ki: (0, 0)),   # gamma
                pl.BlockSpec((1, dim_in), lambda b, qi, ki: (0, 0)),   # beta
                pl.BlockSpec((dim_in, dp), lambda b, qi, ki: (0, 0)),  # wq
                pl.BlockSpec((dim_in, dp), lambda b, qi, ki: (0, 0)),  # wk
                pl.BlockSpec((dim_in, dp), lambda b, qi, ki: (0, 0)),  # wv
                pl.BlockSpec((dp, dout_p), lambda b, qi, ki: (0, 0)),  # w_out
                pl.BlockSpec((1, dout_p), lambda b, qi, ki: (0, 0)),   # b_out
            ],
            out_specs=pl.BlockSpec((pl.Squeezed(), tq, dout_p),
                                   lambda b, qi, ki: (b, qi, 0)),
            scratch_shapes=[
                pltpu.VMEM((tq, dp), jnp.float32),   # q (scaled)
                pltpu.VMEM((tq, 1), jnp.float32),    # running max m
                pltpu.VMEM((tq, 1), jnp.float32),    # running sum l
                pltpu.VMEM((tq, dp), jnp.float32),   # output accumulator
            ],
        ),
        compiler_params=pltpu.CompilerParams(
            dimension_semantics=("parallel", "parallel", "arbitrary"),
            vmem_limit_bytes=32 * 1024 * 1024),      # explicit, v7x-safe
        cost_estimate=cost,
    )(x, x, gamma2, beta2, wq_p, wk_p, wv_p, w_out_p, b_out_p)

    return y_padded[:, :, :dim_out] if dout_p != dim_out else y_padded


def prenorm_attention_reference(x, gamma, beta, w_qkv, w_out, b_out, *,
                                scale, eps=1e-5, causal=False):
    mu = jnp.mean(x, axis=-1, keepdims=True)
    var = jnp.mean((x - mu) ** 2, axis=-1, keepdims=True)
    xn = (x - mu) * jax.lax.rsqrt(var + eps) * gamma + beta
    d = w_qkv.shape[1] // 3
    q = xn @ w_qkv[:, :d]
    k = xn @ w_qkv[:, d:2 * d]
    v = xn @ w_qkv[:, 2 * d:]
    sim = jnp.einsum('bid,bjd->bij', q, k) * scale
    if causal:
        n = sim.shape[-1]
        mask = jnp.triu(jnp.ones((n, n), dtype=bool), k=1)
        sim = jnp.where(mask[None], NEG_INF, sim)
    attn = jax.nn.softmax(sim, axis=-1)
    out = jnp.einsum('bij,bjd->bid', attn, v)
    return out @ w_out + b_out


if __name__ == "__main__":
    # Small shapes: batch=2, seq=128, hidden=32 (tiled 64x64 so the flash
    # online-softmax path with multiple kv steps is actually exercised).
    dim_in, dim_inner, dim_out = 32, 32, 32
    B, N = 2, 128
    causal = False
    scale = dim_inner ** (-0.5)

    key = jax.random.PRNGKey(0)
    kx, kq, ko, kb, kg, kbt = jax.random.split(key, 6)

    x = jax.random.normal(kx, (B, N, dim_in), dtype=jnp.float32)
    # nn.Linear weights are (out, in); stored pre-transposed (in, out) here.
    w_qkv = jax.random.normal(kq, (dim_in, 3 * dim_inner), jnp.float32) * 0.1
    w_out = jax.random.normal(ko, (dim_inner, dim_out), jnp.float32) * 0.1
    b_out = jax.random.normal(kb, (dim_out,), jnp.float32) * 0.1
    gamma = 1.0 + 0.1 * jax.random.normal(kg, (dim_in,), jnp.float32)
    beta = 0.1 * jax.random.normal(kbt, (dim_in,), jnp.float32)

    y = prenorm_attention_pallas(x, gamma, beta, w_qkv, w_out, b_out,
                                 scale=scale, causal=causal, tq=64, tk=64)
    y = jax.block_until_ready(y)

    y_ref = prenorm_attention_reference(x, gamma, beta, w_qkv, w_out, b_out,
                                        scale=scale, causal=causal)
    assert y.shape == y_ref.shape
    # Tolerance accounts for the EUP approximate reciprocal (approx=True);
    # switch to approx=False if a tighter accuracy budget is required.
    max_err = jnp.max(jnp.abs(y - y_ref))
    assert jnp.allclose(y, y_ref, atol=2e-3, rtol=2e-3), f"max abs err {max_err}"

    print("KERNEL_OK")
</pallas_src>

<mosaic_0001>
module attributes {stable_mosaic.version = 11 : i64} {
  func.func @_prenorm_attn_kernel(%arg0: i32, %arg1: i32, %arg2: i32, %arg3: memref<1x64x32xf32, #tpu.memory_space<vmem>>, %arg4: memref<1x64x32xf32, #tpu.memory_space<vmem>>, %arg5: memref<1x32xf32, #tpu.memory_space<vmem>>, %arg6: memref<1x32xf32, #tpu.memory_space<vmem>>, %arg7: memref<32x128xf32, #tpu.memory_space<vmem>>, %arg8: memref<32x128xf32, #tpu.memory_space<vmem>>, %arg9: memref<32x128xf32, #tpu.memory_space<vmem>>, %arg10: memref<128x128xf32, #tpu.memory_space<vmem>>, %arg11: memref<1x128xf32, #tpu.memory_space<vmem>>, %arg12: memref<1x64x128xf32, #tpu.memory_space<vmem>>, %arg13: memref<64x128xf32, #tpu.memory_space<vmem>>, %arg14: memref<64x1xf32, #tpu.memory_space<vmem>>, %arg15: memref<64x1xf32, #tpu.memory_space<vmem>>, %arg16: memref<64x128xf32, #tpu.memory_space<vmem>>) attributes {dimension_semantics = [#tpu.dimension_semantics<parallel>, #tpu.dimension_semantics<parallel>, #tpu.dimension_semantics<arbitrary>], iteration_bounds = array<i64: 2, 2, 2>, scalar_prefetch = 0 : i64, scratch_operands = 4 : i64, tpu.core_type = #tpu.core_type<tc>, window_params = [{transform_indices = @transform_0, window_bounds = array<i64: 1, 64, 32>}, {transform_indices = @transform_1, window_bounds = array<i64: 1, 64, 32>}, {pipeline_mode = #tpu.pipeline_mode<synchronous>, transform_indices = @transform_2, window_bounds = array<i64: 1, 32>}, {pipeline_mode = #tpu.pipeline_mode<synchronous>, transform_indices = @transform_3, window_bounds = array<i64: 1, 32>}, {pipeline_mode = #tpu.pipeline_mode<synchronous>, transform_indices = @transform_4, window_bounds = array<i64: 32, 128>}, {pipeline_mode = #tpu.pipeline_mode<synchronous>, transform_indices = @transform_5, window_bounds = array<i64: 32, 128>}, {pipeline_mode = #tpu.pipeline_mode<synchronous>, transform_indices = @transform_6, window_bounds = array<i64: 32, 128>}, {pipeline_mode = #tpu.pipeline_mode<synchronous>, transform_indices = @transform_7, window_bounds = array<i64: 128, 128>}, {pipeline_mode = #tpu.pipeline_mode<synchronous>, transform_indices = @transform_8, window_bounds = array<i64: 1, 128>}, {transform_indices = @transform_9, window_bounds = array<i64: 1, 64, 128>}]} {
    %c0_i32 = arith.constant 0 : i32
    %0 = arith.cmpi eq, %arg2, %c0_i32 : i32
    %1 = arith.extui %0 : i1 to i32
    %c0_i32_0 = arith.constant 0 : i32
    %2 = arith.cmpi ne, %1, %c0_i32_0 : i32
    scf.if %2 {
      %c0_38 = arith.constant 0 : index
      %c0_39 = arith.constant 0 : index
      %c0_40 = arith.constant 0 : index
      %61 = vector.load %arg3[%c0_38, %c0_39, %c0_40] : memref<1x64x32xf32, #tpu.memory_space<vmem>>, vector<1x64x32xf32>
      %62 = vector.shape_cast %61 : vector<1x64x32xf32> to vector<64x32xf32>
      %cst_41 = arith.constant dense<0.000000e+00> : vector<64xf32>
      %63 = vector.multi_reduction <add>, %62, %cst_41 [1] : vector<64x32xf32> to vector<64xf32>
      %64 = vector.shape_cast %63 : vector<64xf32> to vector<64x1xf32>
      %cst_42 = arith.constant 3.200000e+01 : f32
      %65 = vector.broadcast %cst_42 : f32 to vector<64x1xf32>
      %66 = arith.divf %64, %65 : vector<64x1xf32>
      %67 = vector.broadcast %66 : vector<64x1xf32> to vector<64x32xf32>
      %68 = arith.subf %62, %67 : vector<64x32xf32>
      %69 = arith.mulf %68, %68 : vector<64x32xf32>
      %cst_43 = arith.constant dense<0.000000e+00> : vector<64xf32>
      %70 = vector.multi_reduction <add>, %69, %cst_43 [1] : vector<64x32xf32> to vector<64xf32>
      %71 = vector.shape_cast %70 : vector<64xf32> to vector<64x1xf32>
      %cst_44 = arith.constant 3.200000e+01 : f32
      %72 = vector.broadcast %cst_44 : f32 to vector<64x1xf32>
      %73 = arith.divf %71, %72 : vector<64x1xf32>
      %74 = vector.broadcast %66 : vector<64x1xf32> to vector<64x32xf32>
      %75 = arith.subf %62, %74 : vector<64x32xf32>
      %cst_45 = arith.constant 9.99999974E-6 : f32
      %76 = vector.broadcast %cst_45 : f32 to vector<64x1xf32>
      %77 = arith.addf %73, %76 : vector<64x1xf32>
      %78 = math.rsqrt %77 : vector<64x1xf32>
      %79 = vector.broadcast %78 : vector<64x1xf32> to vector<64x32xf32>
      %80 = arith.mulf %75, %79 : vector<64x32xf32>
      %c0_46 = arith.constant 0 : index
      %c0_47 = arith.constant 0 : index
      %81 = vector.load %arg5[%c0_46, %c0_47] : memref<1x32xf32, #tpu.memory_space<vmem>>, vector<1x32xf32>
      %82 = vector.broadcast %81 : vector<1x32xf32> to vector<64x32xf32>
      %83 = arith.mulf %80, %82 : vector<64x32xf32>
      %c0_48 = arith.constant 0 : index
      %c0_49 = arith.constant 0 : index
      %84 = vector.load %arg6[%c0_48, %c0_49] : memref<1x32xf32, #tpu.memory_space<vmem>>, vector<1x32xf32>
      %85 = vector.broadcast %84 : vector<1x32xf32> to vector<64x32xf32>
      %86 = arith.addf %83, %85 : vector<64x32xf32>
      %c0_50 = arith.constant 0 : index
      %c0_51 = arith.constant 0 : index
      %87 = vector.load %arg7[%c0_50, %c0_51] : memref<32x128xf32, #tpu.memory_space<vmem>>, vector<32x128xf32>
      %cst_52 = arith.constant dense<0.000000e+00> : vector<64x128xf32>
      %88 = tpu.matmul %86, %87, %cst_52 {dimension_numbers = #tpu.dot_dimension_numbers<[1], [0], [0], [1], [0, 0, 1, 1], [], []>} : vector<64x32xf32>, vector<32x128xf32>, vector<64x128xf32> -> vector<64x128xf32>
      %cst_53 = arith.constant 0.176776692 : f32
      %89 = vector.broadcast %cst_53 : f32 to vector<64x128xf32>
      %90 = arith.mulf %88, %89 : vector<64x128xf32>
      %c0_54 = arith.constant 0 : index
      %c0_55 = arith.constant 0 : index
      %91 = vector.load %arg13[%c0_54, %c0_55] : memref<64x128xf32, #tpu.memory_space<vmem>>, vector<64x128xf32>
      tpu.vector_store %arg13[%c0_54, %c0_55], %90 {strides = array<i32>} : memref<64x128xf32, #tpu.memory_space<vmem>>, vector<64x128xf32>,
      %cst_56 = arith.constant -1.000000e+30 : f32
      %92 = vector.broadcast %cst_56 : f32 to vector<64x1xf32>
      %c0_57 = arith.constant 0 : index
      %c0_58 = arith.constant 0 : index
      %93 = vector.load %arg14[%c0_57, %c0_58] : memref<64x1xf32, #tpu.memory_space<vmem>>, vector<64x1xf32>
      tpu.vector_store %arg14[%c0_57, %c0_58], %92 {strides = array<i32>} : memref<64x1xf32, #tpu.memory_space<vmem>>, vector<64x1xf32>,
      %cst_59 = arith.constant 0.000000e+00 : f32
      %94 = vector.broadcast %cst_59 : f32 to vector<64x1xf32>
      %c0_60 = arith.constant 0 : index
      %c0_61 = arith.constant 0 : index
      %95 = vector.load %arg15[%c0_60, %c0_61] : memref<64x1xf32, #tpu.memory_space<vmem>>, vector<64x1xf32>
      tpu.vector_store %arg15[%c0_60, %c0_61], %94 {strides = array<i32>} : memref<64x1xf32, #tpu.memory_space<vmem>>, vector<64x1xf32>,
      %cst_62 = arith.constant 0.000000e+00 : f32
      %96 = vector.broadcast %cst_62 : f32 to vector<64x128xf32>
      %c0_63 = arith.constant 0 : index
      %c0_64 = arith.constant 0 : index
      %97 = vector.load %arg16[%c0_63, %c0_64] : memref<64x128xf32, #tpu.memory_space<vmem>>, vector<64x128xf32>
      tpu.vector_store %arg16[%c0_63, %c0_64], %96 {strides = array<i32>} : memref<64x128xf32, #tpu.memory_space<vmem>>, vector<64x128xf32>,
    } else {
    }
    %c0 = arith.constant 0 : index
    %c0_1 = arith.constant 0 : index
    %c0_2 = arith.constant 0 : index
    %3 = vector.load %arg4[%c0, %c0_1, %c0_2] : memref<1x64x32xf32, #tpu.memory_space<vmem>>, vector<1x64x32xf32>
    %4 = vector.shape_cast %3 : vector<1x64x32xf32> to vector<64x32xf32>
    %cst = arith.constant dense<0.000000e+00> : vector<64xf32>
    %5 = vector.multi_reduction <add>, %4, %cst [1] : vector<64x32xf32> to vector<64xf32>
    %6 = vector.shape_cast %5 : vector<64xf32> to vector<64x1xf32>
    %cst_3 = arith.constant 3.200000e+01 : f32
    %7 = vector.broadcast %cst_3 : f32 to vector<64x1xf32>
    %8 = arith.divf %6, %7 : vector<64x1xf32>
    %9 = vector.broadcast %8 : vector<64x1xf32> to vector<64x32xf32>
    %10 = arith.subf %4, %9 : vector<64x32xf32>
    %11 = arith.mulf %10, %10 : vector<64x32xf32>
    %cst_4 = arith.constant dense<0.000000e+00> : vector<64xf32>
    %12 = vector.multi_reduction <add>, %11, %cst_4 [1] : vector<64x32xf32> to vector<64xf32>
    %13 = vector.shape_cast %12 : vector<64xf32> to vector<64x1xf32>
    %cst_5 = arith.constant 3.200000e+01 : f32
    %14 = vector.broadcast %cst_5 : f32 to vector<64x1xf32>
    %15 = arith.divf %13, %14 : vector<64x1xf32>
    %16 = vector.broadcast %8 : vector<64x1xf32> to vector<64x32xf32>
    %17 = arith.subf %4, %16 : vector<64x32xf32>
    %cst_6 = arith.constant 9.99999974E-6 : f32
    %18 = vector.broadcast %cst_6 : f32 to vector<64x1xf32>
    %19 = arith.addf %15, %18 : vector<64x1xf32>
    %20 = math.rsqrt %19 : vector<64x1xf32>
    %21 = vector.broadcast %20 : vector<64x1xf32> to vector<64x32xf32>
    %22 = arith.mulf %17, %21 : vector<64x32xf32>
    %c0_7 = arith.constant 0 : index
    %c0_8 = arith.constant 0 : index
    %23 = vector.load %arg5[%c0_7, %c0_8] : memref<1x32xf32, #tpu.memory_space<vmem>>, vector<1x32xf32>
    %24 = vector.broadcast %23 : vector<1x32xf32> to vector<64x32xf32>
    %25 = arith.mulf %22, %24 : vector<64x32xf32>
    %c0_9 = arith.constant 0 : index
    %c0_10 = arith.constant 0 : index
    %26 = vector.load %arg6[%c0_9, %c0_10] : memref<1x32xf32, #tpu.memory_space<vmem>>, vector<1x32xf32>
    %27 = vector.broadcast %26 : vector<1x32xf32> to vector<64x32xf32>
    %28 = arith.addf %25, %27 : vector<64x32xf32>
    %c0_11 = arith.constant 0 : index
    %c0_12 = arith.constant 0 : index
    %29 = vector.load %arg8[%c0_11, %c0_12] : memref<32x128xf32, #tpu.memory_space<vmem>>, vector<32x128xf32>
    %cst_13 = arith.constant dense<0.000000e+00> : vector<64x128xf32>
    %30 = tpu.matmul %28, %29, %cst_13 {dimension_numbers = #tpu.dot_dimension_numbers<[1], [0], [0], [1], [0, 0, 1, 1], [], []>} : vector<64x32xf32>, vector<32x128xf32>, vector<64x128xf32> -> vector<64x128xf32>
    %c0_14 = arith.constant 0 : index
    %c0_15 = arith.constant 0 : index
    %31 = vector.load %arg9[%c0_14, %c0_15] : memref<32x128xf32, #tpu.memory_space<vmem>>, vector<32x128xf32>
    %cst_16 = arith.constant dense<0.000000e+00> : vector<64x128xf32>
    %32 = tpu.matmul %28, %31, %cst_16 {dimension_numbers = #tpu.dot_dimension_numbers<[1], [0], [0], [1], [0, 0, 1, 1], [], []>} : vector<64x32xf32>, vector<32x128xf32>, vector<64x128xf32> -> vector<64x128xf32>
    %c0_17 = arith.constant 0 : index
    %c0_18 = arith.constant 0 : index
    %33 = vector.load %arg13[%c0_17, %c0_18] : memref<64x128xf32, #tpu.memory_space<vmem>>, vector<64x128xf32>
    %cst_19 = arith.constant dense<0.000000e+00> : vector<64x64xf32>
    %34 = tpu.matmul %33, %30, %cst_19 {dimension_numbers = #tpu.dot_dimension_numbers<[1], [1], [0], [0], [0, 0, 1, 0], [], []>} : vector<64x128xf32>, vector<64x128xf32>, vector<64x64xf32> -> vector<64x64xf32>
    %c0_20 = arith.constant 0 : index
    %c0_21 = arith.constant 0 : index
    %35 = vector.load %arg14[%c0_20, %c0_21] : memref<64x1xf32, #tpu.memory_space<vmem>>, vector<64x1xf32>
    %cst_22 = arith.constant dense<0xFF800000> : vector<64xf32>
    %36 = vector.multi_reduction <maximumf>, %34, %cst_22 [1] : vector<64x64xf32> to vector<64xf32>
    %37 = vector.shape_cast %36 : vector<64xf32> to vector<64x1xf32>
    %38 = arith.maximumf %35, %37 : vector<64x1xf32>
    %c0_23 = arith.constant 0 : index
    %c0_24 = arith.constant 0 : index
    %39 = vector.load %arg14[%c0_23, %c0_24] : memref<64x1xf32, #tpu.memory_space<vmem>>, vector<64x1xf32>
    %40 = arith.subf %39, %38 : vector<64x1xf32>
    %41 = math.exp %40 : vector<64x1xf32>
    %42 = vector.broadcast %38 : vector<64x1xf32> to vector<64x64xf32>
    %43 = arith.subf %34, %42 : vector<64x64xf32>
    %44 = math.exp %43 : vector<64x64xf32>
    %c0_25 = arith.constant 0 : index
    %c0_26 = arith.constant 0 : index
    %45 = vector.load %arg15[%c0_25, %c0_26] : memref<64x1xf32, #tpu.memory_space<vmem>>, vector<64x1xf32>
    %46 = arith.mulf %41, %45 : vector<64x1xf32>
    %cst_27 = arith.constant dense<0.000000e+00> : vector<64xf32>
    %47 = vector.multi_reduction <add>, %44, %cst_27 [1] : vector<64x64xf32> to vector<64xf32>
    %48 = vector.shape_cast %47 : vector<64xf32> to vector<64x1xf32>
    %49 = arith.addf %46, %48 : vector<64x1xf32>
    %c0_28 = arith.constant 0 : index
    %c0_29 = arith.constant 0 : index
    %50 = vector.load %arg15[%c0_28, %c0_29] : memref<64x1xf32, #tpu.memory_space<vmem>>, vector<64x1xf32>
    tpu.vector_store %arg15[%c0_28, %c0_29], %49 {strides = array<i32>} : memref<64x1xf32, #tpu.memory_space<vmem>>, vector<64x1xf32>,
    %c0_30 = arith.constant 0 : index
    %c0_31 = arith.constant 0 : index
    %51 = vector.load %arg16[%c0_30, %c0_31] : memref<64x128xf32, #tpu.memory_space<vmem>>, vector<64x128xf32>
    %52 = vector.broadcast %41 : vector<64x1xf32> to vector<64x128xf32>
    %53 = arith.mulf %52, %51 : vector<64x128xf32>
    %cst_32 = arith.constant dense<0.000000e+00> : vector<64x128xf32>
    %54 = tpu.matmul %44, %32, %cst_32 {dimension_numbers = #tpu.dot_dimension_numbers<[1], [0], [0], [1], [0, 0, 1, 1], [], []>} : vector<64x64xf32>, vector<64x128xf32>, vector<64x128xf32> -> vector<64x128xf32>
    %55 = arith.addf %53, %54 : vector<64x128xf32>
    %c0_33 = arith.constant 0 : index
    %c0_34 = arith.constant 0 : index
    %56 = vector.load %arg16[%c0_33, %c0_34] : memref<64x128xf32, #tpu.memory_space<vmem>>, vector<64x128xf32>
    tpu.vector_store %arg16[%c0_33, %c0_34], %55 {strides = array<i32>} : memref<64x128xf32, #tpu.memory_space<vmem>>, vector<64x128xf32>,
    %c0_35 = arith.constant 0 : index
    %c0_36 = arith.constant 0 : index
    %57 = vector.load %arg14[%c0_35, %c0_36] : memref<64x1xf32, #tpu.memory_space<vmem>>, vector<64x1xf32>
    tpu.vector_store %arg14[%c0_35, %c0_36], %38 {strides = array<i32>} : memref<64x1xf32, #tpu.memory_space<vmem>>, vector<64x1xf32>,
    %c1_i32 = arith.constant 1 : i32
    %58 = arith.cmpi eq, %arg2, %c1_i32 : i32
    %59 = arith.extui %58 : i1 to i32
    %c0_i32_37 = arith.constant 0 : i32
    %60 = arith.cmpi ne, %59, %c0_i32_37 : i32
    scf.if %60 {
      %c0_38 = arith.constant 0 : index
      %c0_39 = arith.constant 0 : index
      %61 = vector.load %arg16[%c0_38, %c0_39] : memref<64x128xf32, #tpu.memory_space<vmem>>, vector<64x128xf32>
      %c0_40 = arith.constant 0 : index
      %c0_41 = arith.constant 0 : index
      %62 = vector.load %arg15[%c0_40, %c0_41] : memref<64x1xf32, #tpu.memory_space<vmem>>, vector<64x1xf32>
      %63 = tpu.reciprocal %62 {approx = true} : vector<64x1xf32> -> vector<64x1xf32>
      %64 = vector.broadcast %63 : vector<64x1xf32> to vector<64x128xf32>
      %65 = arith.mulf %61, %64 : vector<64x128xf32>
      %c0_42 = arith.constant 0 : index
      %c0_43 = arith.constant 0 : index
      %66 = vector.load %arg10[%c0_42, %c0_43] : memref<128x128xf32, #tpu.memory_space<vmem>>, vector<128x128xf32>
      %cst_44 = arith.constant dense<0.000000e+00> : vector<64x128xf32>
      %67 = tpu.matmul %65, %66, %cst_44 {dimension_numbers = #tpu.dot_dimension_numbers<[1], [0], [0], [1], [0, 0, 1, 1], [], []>} : vector<64x128xf32>, vector<128x128xf32>, vector<64x128xf32> -> vector<64x128xf32>
      %c0_45 = arith.constant 0 : index
      %c0_46 = arith.constant 0 : index
      %68 = vector.load %arg11[%c0_45, %c0_46] : memref<1x128xf32, #tpu.memory_space<vmem>>, vector<1x128xf32>
      %69 = vector.broadcast %68 : vector<1x128xf32> to vector<64x128xf32>
      %70 = arith.addf %67, %69 : vector<64x128xf32>
      %c0_47 = arith.constant 0 : index
      %c0_48 = arith.constant 0 : index
      %c0_49 = arith.constant 0 : index
      %71 = vector.load %arg12[%c0_47, %c0_48, %c0_49] : memref<1x64x128xf32, #tpu.memory_space<vmem>>, vector<1x64x128xf32>
      %72 = vector.shape_cast %71 : vector<1x64x128xf32> to vector<64x128xf32>
      %73 = vector.shape_cast %70 : vector<64x128xf32> to vector<1x64x128xf32>
      tpu.vector_store %arg12[%c0_47, %c0_48, %c0_49], %73 {strides = array<i32>} : memref<1x64x128xf32, #tpu.memory_space<vmem>>, vector<1x64x128xf32>,
    } else {
    }
    return
  }
  func.func @transform_0(%arg0: i32, %arg1: i32, %arg2: i32) -> (i32, i32, i32) {
    %c0_i32 = arith.constant 0 : i32
    %c0_i32_0 = arith.constant 0 : i32
    return %arg0, %arg1, %c0_i32 : i32, i32, i32
  }
  func.func @transform_1(%arg0: i32, %arg1: i32, %arg2: i32) -> (i32, i32, i32) {
    %c0_i32 = arith.constant 0 : i32
    %c0_i32_0 = arith.constant 0 : i32
    return %arg0, %arg2, %c0_i32 : i32, i32, i32
  }
  func.func @transform_2(%arg0: i32, %arg1: i32, %arg2: i32) -> (i32, i32) {
    %c0_i32 = arith.constant 0 : i32
    %c0_i32_0 = arith.constant 0 : i32
    %c0_i32_1 = arith.constant 0 : i32
    return %c0_i32, %c0_i32_0 : i32, i32
  }
  func.func @transform_3(%arg0: i32, %arg1: i32, %arg2: i32) -> (i32, i32) {
    %c0_i32 = arith.constant 0 : i32
    %c0_i32_0 = arith.constant 0 : i32
    %c0_i32_1 = arith.constant 0 : i32
    return %c0_i32, %c0_i32_0 : i32, i32
  }
  func.func @transform_4(%arg0: i32, %arg1: i32, %arg2: i32) -> (i32, i32) {
    %c0_i32 = arith.constant 0 : i32
    %c0_i32_0 = arith.constant 0 : i32
    %c0_i32_1 = arith.constant 0 : i32
    return %c0_i32, %c0_i32_0 : i32, i32
  }
  func.func @transform_5(%arg0: i32, %arg1: i32, %arg2: i32) -> (i32, i32) {
    %c0_i32 = arith.constant 0 : i32
    %c0_i32_0 = arith.constant 0 : i32
    %c0_i32_1 = arith.constant 0 : i32
    return %c0_i32, %c0_i32_0 : i32, i32
  }
  func.func @transform_6(%arg0: i32, %arg1: i32, %arg2: i32) -> (i32, i32) {
    %c0_i32 = arith.constant 0 : i32
    %c0_i32_0 = arith.constant 0 : i32
    %c0_i32_1 = arith.constant 0 : i32
    return %c0_i32, %c0_i32_0 : i32, i32
  }
  func.func @transform_7(%arg0: i32, %arg1: i32, %arg2: i32) -> (i32, i32) {
    %c0_i32 = arith.constant 0 : i32
    %c0_i32_0 = arith.constant 0 : i32
    %c0_i32_1 = arith.constant 0 : i32
    return %c0_i32, %c0_i32_0 : i32, i32
  }
  func.func @transform_8(%arg0: i32, %arg1: i32, %arg2: i32) -> (i32, i32) {
    %c0_i32 = arith.constant 0 : i32
    %c0_i32_0 = arith.constant 0 : i32
    %c0_i32_1 = arith.constant 0 : i32
    return %c0_i32, %c0_i32_0 : i32, i32
  }
  func.func @transform_9(%arg0: i32, %arg1: i32, %arg2: i32) -> (i32, i32, i32) {
    %c0_i32 = arith.constant 0 : i32
    %c0_i32_0 = arith.constant 0 : i32
    return %arg0, %arg1, %c0_i32 : i32, i32, i32
  }
}

</mosaic_0001>

<llo_original>
// kernel: tpu_custom_call.1
$region0: #{tpu_custom_call.1}
  #allocation0 [shape = 'u32[]', space=smem, size = 0x4, offset = 0x4, fixed_abs, tag = 'smem constant byte address 0x4 - core index']
  #allocation1 [shape = 'u32[144,128]{1,0:T(1,128)}', space=vmem, size = 0x12000, scoped, tag = 'internal scratch']
  #allocation2 [shape = 'f32[64,128]{1,0:T(8,128)}', space=vmem, size = 0x8000, scoped, tag = 'scratch operand']
  #allocation3 [shape = 'f32[64,1]{1,0:T(8,128)}', space=vmem, size = 0x8000, scoped, tag = 'scratch operand']
  #allocation4 [shape = 'f32[64,1]{1,0:T(8,128)}', space=vmem, size = 0x8000, scoped, tag = 'scratch operand']
  #allocation5 [shape = 'f32[64,128]{1,0:T(8,128)}', space=vmem, size = 0x8000, scoped, tag = 'scratch operand']
  %s0 = inlined_call_operand.vmem [shape: f32[2,128,32], index: 0, kind: input, shape index: {}]
  %s1 = inlined_call_operand.vmem [shape: f32[2,128,32], index: 1, kind: input, shape index: {}]
  %s2 = inlined_call_operand.vmem [shape: f32[1,32], index: 2, kind: input, shape index: {}]
  %s3 = inlined_call_operand.vmem [shape: f32[1,32], index: 3, kind: input, shape index: {}]
  %s4 = inlined_call_operand.vmem [shape: f32[32,128], index: 4, kind: input, shape index: {}]
  %s5 = inlined_call_operand.vmem [shape: f32[32,128], index: 5, kind: input, shape index: {}]
  %s6 = inlined_call_operand.vmem [shape: f32[32,128], index: 6, kind: input, shape index: {}]
  %s7 = inlined_call_operand.vmem [shape: f32[128,128], index: 7, kind: input, shape index: {}]
  %s8 = inlined_call_operand.vmem [shape: f32[1,128], index: 8, kind: input, shape index: {}]
  %s9 = inlined_call_operand.hbm [shape: f32[2,128,128], index: 9, kind: output, shape index: {}]
  %s10 = sld [smem:[#allocation0]]
  $region77: #{tpu_custom_call.1} parent=0
    _
  %s12 = ssub.s32 1, %s10
  %s13 = scalar_select 0, %s12, %s10
  $region1: #{tpu_custom_call.1} parent=0
    #allocation6 [shape = 'u8[65536]{0}', space=vmem, size = 0x10000, scoped, tag = 'output window, operand 0']
    #allocation7 [shape = 's32[2]{0}', space=sflag, size = 0x8, scoped, tag = 'scoped memory for tpu_custom_call.1']
    %14 = vsyncpa [#allocation7], 0
    %s15 = scalar_lea.sflag [#allocation7], 1
    %16 = vsyncpa %s15, 0
    loop: start=0, step=1, limit=10
    $region2: #{tpu_custom_call.1} parent=1 // loop_pre_header
      _
    $region3: #{tpu_custom_call.1} parent=1 // loop_header
      %s18 = sphi 0, %s22
      %p19 = scmp.ge.s32.totalorder %s18, 10
      %s25 = sphi 0, %s44
      %s26 = sphi 0, %s40
      %s27 = sphi 0, %s36
      %s28 = sphi 0, %s25
      %s29 = sphi 0, %s26
      %s30 = sphi 0, %s27
      %s31 = sphi 0, %s28
      %s32 = sphi 0, %s29
      %s33 = sphi 0, %s30
      %s49 = sphi 0, %s51
      %s52 = sphi 0, %s49
      %s53 = sphi 0, %s52
      %s69 = sphi 0, %s53
      %s77 = sphi 0, %s79
      %s80 = sphi 0, %s77
      %s81 = sphi 0, %s80
      %s97 = sphi 0, %s81
      %s101 = sphi 0, %s101
      %s103 = sphi 0, %s101
      %s104 = sphi 0, %s103
      %s118 = sphi 0, %s104
      %s122 = sphi 0, %s122
      %s124 = sphi 0, %s122
      %s125 = sphi 0, %s124
      %s139 = sphi 0, %s125
      %s143 = sphi 0, %s143
      %s145 = sphi 0, %s143
      %s146 = sphi 0, %s145
      %s160 = sphi 0, %s146
      %s164 = sphi 0, %s164
      %s166 = sphi 0, %s164
      %s167 = sphi 0, %s166
      %s181 = sphi 0, %s167
      %s185 = sphi 0, %s185
      %s187 = sphi 0, %s185
      %s188 = sphi 0, %s187
      %s202 = sphi 0, %s188
      %s206 = sphi 0, %s206
      %s208 = sphi 0, %s206
      %s209 = sphi 0, %s208
      %s223 = sphi 0, %s209
      %s227 = sphi 0, %s227
      %s229 = sphi 0, %s227
      %s230 = sphi 0, %s229
      %s244 = sphi 0, %s230
      %s252 = sphi 0, %s254
      %s255 = sphi 0, %s252
      %s256 = sphi 0, %s255
      %s272 = sphi 0, %s256
    $region4: #{tpu_custom_call.1} parent=1 // loop_header_branch
      %21 = sbr.rel (%p19) target = $region8
    $region5: #{tpu_custom_call.1} parent=1 // loop_body
      %s23 = ssub.s32 %s18, 1
      %s24 = ssub.s32 %s18, 2
      %s34 = sadd.s32 1, %s27
      %p35 = scmp.ge.s32.totalorder %s34, 2
      %s36 = scalar_select %p35, 0, %s34
      %s37 = sadd.s32 1, %s26
      %s38 = scalar_select %p35, %s37, %s26
      %p39 = scmp.ge.s32.totalorder %s38, 2
      %s40 = scalar_select %p39, 0, %s38
      %s41 = sadd.s32 1, %s25
      %s42 = scalar_select %p39, %s41, %s25
      %p43 = scmp.ge.s32.totalorder %s42, 2
      %s44 = scalar_select %p43, 0, %s42
      %s45 = ssub.s32 %s25, %s44
      %s46 = ssub.s32 %s26, %s40
      %s47 = sor.u32 %s45, %s46
      %p48 = scmp.eq.s32.totalorder %s47, 0
      %s50 = sadd.s32 %s49, 1
      %s51 = scalar_select %p48, %s49, %s50
      %p54 = pneg %p48
      %p55 = scmp.eq.s32.totalorder %s18, 7
      %p56 = por %p54, %p55
      %p57 = scmp.ne.s32.totalorder %s49, %s52
      %p58 = scmp.eq.s32.totalorder %s18, 0
      %p59 = por %p57, %p58
      %p60 = scmp.ne.s32.totalorder %s49, %s52
      %p61 = scmp.eq.s32.totalorder %s23, 7
      %p62 = por %p60, %p61
      %p63 = scmp.ne.s32.totalorder %s52, %s53
      %p64 = scmp.eq.s32.totalorder %s23, 0
      %p65 = por %p63, %p64
      %p66 = scmp.ne.s32.totalorder %s52, %s53
      %p67 = scmp.eq.s32.totalorder %s24, 7
      %p68 = por %p66, %p67
      %p70 = scmp.ne.s32.totalorder %s53, %s69
      %p71 = scmp.eq.s32.totalorder %s24, 0
      %p72 = por %p70, %p71
      %s73 = ssub.s32 %s25, %s44
      %s74 = ssub.s32 %s27, %s36
      %s75 = sor.u32 %s73, %s74
      %p76 = scmp.eq.s32.totalorder %s75, 0
      %s78 = sadd.s32 %s77, 1
      %s79 = scalar_select %p76, %s77, %s78
      %p82 = pneg %p76
      %p83 = scmp.eq.s32.totalorder %s18, 7
      %p84 = por %p82, %p83
      %p85 = scmp.ne.s32.totalorder %s77, %s80
      %p86 = scmp.eq.s32.totalorder %s18, 0
      %p87 = por %p85, %p86
      %p88 = scmp.ne.s32.totalorder %s77, %s80
      %p89 = scmp.eq.s32.totalorder %s23, 7
      %p90 = por %p88, %p89
      %p91 = scmp.ne.s32.totalorder %s80, %s81
      %p92 = scmp.eq.s32.totalorder %s23, 0
      %p93 = por %p91, %p92
      %p94 = scmp.ne.s32.totalorder %s80, %s81
      %p95 = scmp.eq.s32.totalorder %s24, 7
      %p96 = por %p94, %p95
      %p98 = scmp.ne.s32.totalorder %s81, %s97
      %p99 = scmp.eq.s32.totalorder %s24, 0
      %p100 = por %p98, %p99
      %s102 = sadd.s32 %s101, 1
      %p105 = scmp.eq.s32.totalorder %s18, 7
      %p106 = scmp.ne.s32.totalorder %s101, %s103
      %p107 = scmp.eq.s32.totalorder %s18, 0
      %p108 = por %p106, %p107
      %p109 = scmp.ne.s32.totalorder %s101, %s103
      %p110 = scmp.eq.s32.totalorder %s23, 7
      %p111 = por %p109, %p110
      %p112 = scmp.ne.s32.totalorder %s103, %s104
      %p113 = scmp.eq.s32.totalorder %s23, 0
      %p114 = por %p112, %p113
      %p115 = scmp.ne.s32.totalorder %s103, %s104
      %p116 = scmp.eq.s32.totalorder %s24, 7
      %p117 = por %p115, %p116
      %p119 = scmp.ne.s32.totalorder %s104, %s118
      %p120 = scmp.eq.s32.totalorder %s24, 0
      %p121 = por %p119, %p120
      %s123 = sadd.s32 %s122, 1
      %p126 = scmp.eq.s32.totalorder %s18, 7
      %p127 = scmp.ne.s32.totalorder %s122, %s124
      %p128 = scmp.eq.s32.totalorder %s18, 0
      %p129 = por %p127, %p128
      %p130 = scmp.ne.s32.totalorder %s122, %s124
      %p131 = scmp.eq.s32.totalorder %s23, 7
      %p132 = por %p130, %p131
      %p133 = scmp.ne.s32.totalorder %s124, %s125
      %p134 = scmp.eq.s32.totalorder %s23, 0
      %p135 = por %p133, %p134
      %p136 = scmp.ne.s32.totalorder %s124, %s125
      %p137 = scmp.eq.s32.totalorder %s24, 7
      %p138 = por %p136, %p137
      %p140 = scmp.ne.s32.totalorder %s125, %s139
      %p141 = scmp.eq.s32.totalorder %s24, 0
      %p142 = por %p140, %p141
      %s144 = sadd.s32 %s143, 1
      %p147 = scmp.eq.s32.totalorder %s18, 7
      %p148 = scmp.ne.s32.totalorder %s143, %s145
      %p149 = scmp.eq.s32.totalorder %s18, 0
      %p150 = por %p148, %p149
      %p151 = scmp.ne.s32.totalorder %s143, %s145
      %p152 = scmp.eq.s32.totalorder %s23, 7
      %p153 = por %p151, %p152
      %p154 = scmp.ne.s32.totalorder %s145, %s146
      %p155 = scmp.eq.s32.totalorder %s23, 0
      %p156 = por %p154, %p155
      %p157 = scmp.ne.s32.totalorder %s145, %s146
      %p158 = scmp.eq.s32.totalorder %s24, 7
      %p159 = por %p157, %p158
      %p161 = scmp.ne.s32.totalorder %s146, %s160
      %p162 = scmp.eq.s32.totalorder %s24, 0
      %p163 = por %p161, %p162
      %s165 = sadd.s32 %s164, 1
      %p168 = scmp.eq.s32.totalorder %s18, 7
      %p169 = scmp.ne.s32.totalorder %s164, %s166
      %p170 = scmp.eq.s32.totalorder %s18, 0
      %p171 = por %p169, %p170
      %p172 = scmp.ne.s32.totalorder %s164, %s166
      %p173 = scmp.eq.s32.totalorder %s23, 7
      %p174 = por %p172, %p173
      %p175 = scmp.ne.s32.totalorder %s166, %s167
      %p176 = scmp.eq.s32.totalorder %s23, 0
      %p177 = por %p175, %p176
      %p178 = scmp.ne.s32.totalorder %s166, %s167
      %p179 = scmp.eq.s32.totalorder %s24, 7
      %p180 = por %p178, %p179
      %p182 = scmp.ne.s32.totalorder %s167, %s181
      %p183 = scmp.eq.s32.totalorder %s24, 0
      %p184 = por %p182, %p183
      %s186 = sadd.s32 %s185, 1
      %p189 = scmp.eq.s32.totalorder %s18, 7
      %p190 = scmp.ne.s32.totalorder %s185, %s187
      %p191 = scmp.eq.s32.totalorder %s18, 0
      %p192 = por %p190, %p191
      %p193 = scmp.ne.s32.totalorder %s185, %s187
      %p194 = scmp.eq.s32.totalorder %s23, 7
      %p195 = por %p193, %p194
      %p196 = scmp.ne.s32.totalorder %s187, %s188
      %p197 = scmp.eq.s32.totalorder %s23, 0
      %p198 = por %p196, %p197
      %p199 = scmp.ne.s32.totalorder %s187, %s188
      %p200 = scmp.eq.s32.totalorder %s24, 7
      %p201 = por %p199, %p200
      %p203 = scmp.ne.s32.totalorder %s188, %s202
      %p204 = scmp.eq.s32.totalorder %s24, 0
      %p205 = por %p203, %p204
      %s207 = sadd.s32 %s206, 1
      %p210 = scmp.eq.s32.totalorder %s18, 7
      %p211 = scmp.ne.s32.totalorder %s206, %s208
      %p212 = scmp.eq.s32.totalorder %s18, 0
      %p213 = por %p211, %p212
      %p214 = scmp.ne.s32.totalorder %s206, %s208
      %p215 = scmp.eq.s32.totalorder %s23, 7
      %p216 = por %p214, %p215
      %p217 = scmp.ne.s32.totalorder %s208, %s209
      %p218 = scmp.eq.s32.totalorder %s23, 0
      %p219 = por %p217, %p218
      %p220 = scmp.ne.s32.totalorder %s208, %s209
      %p221 = scmp.eq.s32.totalorder %s24, 7
      %p222 = por %p220, %p221
      %p224 = scmp.ne.s32.totalorder %s209, %s223
      %p225 = scmp.eq.s32.totalorder %s24, 0
      %p226 = por %p224, %p225
      %s228 = sadd.s32 %s227, 1
      %p231 = scmp.eq.s32.totalorder %s18, 7
      %p232 = scmp.ne.s32.totalorder %s227, %s229
      %p233 = scmp.eq.s32.totalorder %s18, 0
      %p234 = por %p232, %p233
      %p235 = scmp.ne.s32.totalorder %s227, %s229
      %p236 = scmp.eq.s32.totalorder %s23, 7
      %p237 = por %p235, %p236
      %p238 = scmp.ne.s32.totalorder %s229, %s230
      %p239 = scmp.eq.s32.totalorder %s23, 0
      %p240 = por %p238, %p239
      %p241 = scmp.ne.s32.totalorder %s229, %s230
      %p242 = scmp.eq.s32.totalorder %s24, 7
      %p243 = por %p241, %p242
      %p245 = scmp.ne.s32.totalorder %s230, %s244
      %p246 = scmp.eq.s32.totalorder %s24, 0
      %p247 = por %p245, %p246
      %s248 = ssub.s32 %s25, %s44
      %s249 = ssub.s32 %s26, %s40
      %s250 = sor.u32 %s248, %s249
      %p251 = scmp.eq.s32.totalorder %s250, 0
      %s253 = sadd.s32 %s252, 1
      %s254 = scalar_select %p251, %s252, %s253
      %p257 = pneg %p251
      %p258 = scmp.eq.s32.totalorder %s18, 7
      %p259 = por %p257, %p258
      %p260 = scmp.ne.s32.totalorder %s252, %s255
      %p261 = scmp.eq.s32.totalorder %s18, 0
      %p262 = por %p260, %p261
      %p263 = scmp.ne.s32.totalorder %s252, %s255
      %p264 = scmp.eq.s32.totalorder %s23, 7
      %p265 = por %p263, %p264
      %p266 = scmp.ne.s32.totalorder %s255, %s256
      %p267 = scmp.eq.s32.totalorder %s23, 0
      %p268 = por %p266, %p267
      %p269 = scmp.ne.s32.totalorder %s255, %s256
      %p270 = scmp.eq.s32.totalorder %s24, 7
      %p271 = por %p269, %p270
      %p273 = scmp.ne.s32.totalorder %s256, %s272
      %p274 = scmp.eq.s32.totalorder %s24, 0
      %p275 = por %p273, %p274
      %p276 = scmp.le.s32.totalorder 1, %s18
      %p277 = scmp.lt.s32.totalorder %s18, 9
      %p278 = pnand %p276, %p277
      %p279 = pneg %p278
      // Predicated region
      $region9: #{tpu_custom_call.1} parent=5 // pred_check
        _
      $region10: #{tpu_custom_call.1} parent=5 // pred_check_branch
        %281 = sbr.rel (%p278) target = $region12
      $region11: #{tpu_custom_call.1} parent=5 // pred_region
        %s282 = ssub.s32 %s18, 1
        // Predicated region
        $region13: #{tpu_custom_call.1} parent=11 // pred_check
          %p283 = pneg %p114
        $region14: #{tpu_custom_call.1} parent=11 // pred_check_branch
          %285 = sbr.rel (%p283) target = $region16
        $region15: #{tpu_custom_call.1} parent=11 // pred_region
          _
        $region16: #{tpu_custom_call.1} parent=11 // pred_fallthru
          _
        // Predicated region
        $region17: #{tpu_custom_call.1} parent=11 // pred_check
          %p286 = pneg %p135
        $region18: #{tpu_custom_call.1} parent=11 // pred_check_branch
          %288 = sbr.rel (%p286) target = $region20
        $region19: #{tpu_custom_call.1} parent=11 // pred_region
          _
        $region20: #{tpu_custom_call.1} parent=11 // pred_fallthru
          _
        // Predicated region
        $region21: #{tpu_custom_call.1} parent=11 // pred_check
          %p289 = pneg %p156
        $region22: #{tpu_custom_call.1} parent=11 // pred_check_branch
          %291 = sbr.rel (%p289) target = $region24
        $region23: #{tpu_custom_call.1} parent=11 // pred_region
          _
        $region24: #{tpu_custom_call.1} parent=11 // pred_fallthru
          _
        // Predicated region
        $region25: #{tpu_custom_call.1} parent=11 // pred_check
          %p292 = pneg %p177
        $region26: #{tpu_custom_call.1} parent=11 // pred_check_branch
          %294 = sbr.rel (%p292) target = $region28
        $region27: #{tpu_custom_call.1} parent=11 // pred_region
          _
        $region28: #{tpu_custom_call.1} parent=11 // pred_fallthru
          _
        // Predicated region
        $region29: #{tpu_custom_call.1} parent=11 // pred_check
          %p295 = pneg %p198
        $region30: #{tpu_custom_call.1} parent=11 // pred_check_branch
          %297 = sbr.rel (%p295) target = $region32
        $region31: #{tpu_custom_call.1} parent=11 // pred_region
          _
        $region32: #{tpu_custom_call.1} parent=11 // pred_fallthru
          _
        // Predicated region
        $region33: #{tpu_custom_call.1} parent=11 // pred_check
          %p298 = pneg %p219
        $region34: #{tpu_custom_call.1} parent=11 // pred_check_branch
          %300 = sbr.rel (%p298) target = $region36
        $region35: #{tpu_custom_call.1} parent=11 // pred_region
          _
        $region36: #{tpu_custom_call.1} parent=11 // pred_fallthru
          _
        // Predicated region
        $region37: #{tpu_custom_call.1} parent=11 // pred_check
          %p301 = pneg %p240
        $region38: #{tpu_custom_call.1} parent=11 // pred_check_branch
          %303 = sbr.rel (%p301) target = $region40
        $region39: #{tpu_custom_call.1} parent=11 // pred_region
          _
        $region40: #{tpu_custom_call.1} parent=11 // pred_fallthru
          _
      $region12: #{tpu_custom_call.1} parent=5 // pred_fallthru
        _
      %p304 = scmp.lt.s32.totalorder %s18, 8
      // Predicated region
      $region41: #{tpu_custom_call.1} parent=5 // pred_check
        %p305 = pneg %p304
      $region42: #{tpu_custom_call.1} parent=5 // pred_check_branch
        %307 = sbr.rel (%p305) target = $region44
      $region43: #{tpu_custom_call.1} parent=5 // pred_region
        // Predicated region
        $region45: #{tpu_custom_call.1} parent=43 // pred_check
          %p308 = pneg %p59
        $region46: #{tpu_custom_call.1} parent=43 // pred_check_branch
          %310 = sbr.rel (%p308) target = $region48
        $region47: #{tpu_custom_call.1} parent=43 // pred_region
          %s311 = smul.u32 8, %s26
          %p312 = scmp.lt.s32.totalorder %s25, 1
          %s313 = scalar_select %p312, %s25, 1
          %p314 = scmp.lt.s32.totalorder %s311, 15
          %s315 = scalar_select %p314, %s311, 15
          %s316 = smul.addr %s313, 16
          %s317 = sadd.s32 %s315, %s316
          %s318 = smul.addr %s317, 8
          %s319 = scalar_lea.vmem %s0, %s318
          %s320 = smul.u32 8, %s26
        $region48: #{tpu_custom_call.1} parent=43 // pred_fallthru
          _
        // Predicated region
        $region49: #{tpu_custom_call.1} parent=43 // pred_check
          %p321 = pneg %p87
        $region50: #{tpu_custom_call.1} parent=43 // pred_check_branch
          %323 = sbr.rel (%p321) target = $region52
        $region51: #{tpu_custom_call.1} parent=43 // pred_region
          %s324 = smul.u32 8, %s27
          %p325 = scmp.lt.s32.totalorder %s25, 1
          %s326 = scalar_select %p325, %s25, 1
          %p327 = scmp.lt.s32.totalorder %s324, 15
          %s328 = scalar_select %p327, %s324, 15
          %s329 = smul.addr %s326, 16
          %s330 = sadd.s32 %s328, %s329
          %s331 = smul.addr %s330, 8
          %s332 = scalar_lea.vmem %s1, %s331
          %s333 = smul.u32 8, %s27
        $region52: #{tpu_custom_call.1} parent=43 // pred_fallthru
          _
      $region44: #{tpu_custom_call.1} parent=5 // pred_fallthru
        _
      %p334 = scmp.le.s32.totalorder 1, %s18
      %p335 = scmp.lt.s32.totalorder %s18, 9
      %p336 = pnand %p334, %p335
      %p337 = pneg %p336
      // Predicated region
      $region53: #{tpu_custom_call.1} parent=5 // pred_check
        _
      $region54: #{tpu_custom_call.1} parent=5 // pred_check_branch
        %339 = sbr.rel (%p336) target = $region56
      $region55: #{tpu_custom_call.1} parent=5 // pred_region
        %s340 = ssub.s32 %s18, 1
        %s341 = smul.u32 8, %s29
        %p342 = scmp.lt.s32.totalorder %s28, 1
        %s343 = scalar_select %p342, %s28, 1
        %p344 = scmp.lt.s32.totalorder %s341, 15
        %s345 = scalar_select %p344, %s341, 15
        %s346 = smul.addr %s343, 16
        %s347 = sadd.s32 %s345, %s346
        %s348 = smul.addr %s347, 8
        %s349 = scalar_lea.vmem %s0, %s348
        %p350 = pneg %p65
        %p351 = pneg %p62
        %s352 = smul.u32 8, %s30
        %p353 = scmp.lt.s32.totalorder %s28, 1
        %s354 = scalar_select %p353, %s28, 1
        %p355 = scmp.lt.s32.totalorder %s352, 15
        %s356 = scalar_select %p355, %s352, 15
        %s357 = smul.addr %s354, 16
        %s358 = sadd.s32 %s356, %s357
        %s359 = smul.addr %s358, 8
        %s360 = scalar_lea.vmem %s1, %s359
        %p361 = pneg %p93
        %p362 = pneg %p90
        %p363 = pneg %p114
        %p364 = pneg %p111
        %p365 = pneg %p135
        %p366 = pneg %p132
        %p367 = pneg %p156
        %p368 = pneg %p153
        %p369 = pneg %p177
        %p370 = pneg %p174
        %p371 = pneg %p198
        %p372 = pneg %p195
        %p373 = pneg %p219
        %p374 = pneg %p216
        %p375 = pneg %p240
        %p376 = pneg %p237
        %p377 = pneg %p268
        %p378 = pneg %p265
        %s379 = sand.u32 %s255, 1
        %s380 = scalar_lea.sflag [#allocation7], %s379
        %s381 = sand.u32 %s255, 1
        %s382 = smul.addr %s381, 64
        %s383 = scalar_lea.vmem [#allocation6], %s382
        %s384 = smul.u32 8, %s29
        %p385 = scmp.lt.s32.totalorder %s28, 1
        %s386 = scalar_select %p385, %s28, 1
        %p387 = scmp.lt.s32.totalorder %s384, 15
        %s388 = scalar_select %p387, %s384, 15
        %s389 = smul.addr %s386, 16
        %s390 = sadd.s32 %s388, %s389
        %s391 = smul.addr %s390, 8
        %s392 = scalar_lea.vmem %s0, %s391
        %s393 = smul.u32 8, %s29
        %s394 = smul.u32 8, %s30
        %p395 = scmp.lt.s32.totalorder %s28, 1
        %s396 = scalar_select %p395, %s28, 1
        %p397 = scmp.lt.s32.totalorder %s394, 15
        %s398 = scalar_select %p397, %s394, 15
        %s399 = smul.addr %s396, 16
        %s400 = sadd.s32 %s398, %s399
        %s401 = smul.addr %s400, 8
        %s402 = scalar_lea.vmem %s1, %s401
        %s403 = smul.u32 8, %s30
        %s404 = smul.u32 8, %s29
        %p405 = scmp.eq.s32.totalorder %s30, 0
        // Predicated region
        $region57: #{tpu_custom_call.1} parent=55 // pred_check
          %p406 = pneg %p405
        $region58: #{tpu_custom_call.1} parent=55 // pred_check_branch
          %408 = sbr.rel (%p406) target = $region60
        $region59: #{tpu_custom_call.1} parent=55 // pred_region
          %v409 = vld [vmem:[%s392] sm:$0xff]
          %v410 = vld [vmem:[%s392 + $0x8] sm:$0xff]
          %v411 = vld [vmem:[%s392 + $0x10] sm:$0xff]
          %v412 = vld [vmem:[%s392 + $0x18] sm:$0xff]
          %v413 = vld [vmem:[%s392 + $0x20] sm:$0xff]
          %v414 = vld [vmem:[%s392 + $0x28] sm:$0xff]
          %v415 = vld [vmem:[%s392 + $0x30] sm:$0xff]
          %v416 = vld [vmem:[%s392 + $0x38] sm:$0xff]
          %vm417 = vcmask 261120
          %v418 = vsel %vm417, %v409, 0.0
          %419 = vadd.xlane.f32.xlu0 %v418
          %v420 = vpop.xlane.xlu0 %419
          %v421 = vsel %vm417, %v410, 0.0
          %422 = vadd.xlane.f32.xlu0 %v421
          %v423 = vpop.xlane.xlu0 %422
          %v424 = vsel %vm417, %v411, 0.0
          %425 = vadd.xlane.f32.xlu0 %v424
          %v426 = vpop.xlane.xlu0 %425
          %v427 = vsel %vm417, %v412, 0.0
          %428 = vadd.xlane.f32.xlu0 %v427
          %v429 = vpop.xlane.xlu0 %428
          %v430 = vsel %vm417, %v413, 0.0
          %431 = vadd.xlane.f32.xlu0 %v430
          %v432 = vpop.xlane.xlu0 %431
          %v433 = vsel %vm417, %v414, 0.0
          %434 = vadd.xlane.f32.xlu0 %v433
          %v435 = vpop.xlane.xlu0 %434
          %v436 = vsel %vm417, %v415, 0.0
          %437 = vadd.xlane.f32.xlu0 %v436
          %v438 = vpop.xlane.xlu0 %437
          %v439 = vsel %vm417, %v416, 0.0
          %440 = vadd.xlane.f32.xlu0 %v439
          %v441 = vpop.xlane.xlu0 %440
          %v442 = vrcp.pop 32.0
          %v443 = vmul.f32 %v420, %v442
          %v444 = vmul.f32 %v423, %v442
          %v445 = vmul.f32 %v426, %v442
          %v446 = vmul.f32 %v429, %v442
          %v447 = vmul.f32 %v432, %v442
          %v448 = vmul.f32 %v435, %v442
          %v449 = vmul.f32 %v438, %v442
          %v450 = vmul.f32 %v441, %v442
          %v451 = vsub.f32 %v409, %v443
          %v452 = vsub.f32 %v410, %v444
          %v453 = vsub.f32 %v411, %v445
          %v454 = vsub.f32 %v412, %v446
          %v455 = vsub.f32 %v413, %v447
          %v456 = vsub.f32 %v414, %v448
          %v457 = vsub.f32 %v415, %v449
          %v458 = vsub.f32 %v416, %v450
          %v459 = vmul.f32 %v451, %v451
          %v460 = vmul.f32 %v452, %v452
          %v461 = vmul.f32 %v453, %v453
          %v462 = vmul.f32 %v454, %v454
          %v463 = vmul.f32 %v455, %v455
          %v464 = vmul.f32 %v456, %v456
          %v465 = vmul.f32 %v457, %v457
          %v466 = vmul.f32 %v458, %v458
          %v467 = vsel %vm417, %v459, 0.0
          %468 = vadd.xlane.f32.xlu0 %v467
          %v469 = vpop.xlane.xlu0 %468
          %v470 = vsel %vm417, %v460, 0.0
          %471 = vadd.xlane.f32.xlu0 %v470
          %v472 = vpop.xlane.xlu0 %471
          %v473 = vsel %vm417, %v461, 0.0
          %474 = vadd.xlane.f32.xlu0 %v473
          %v475 = vpop.xlane.xlu0 %474
          %v476 = vsel %vm417, %v462, 0.0
          %477 = vadd.xlane.f32.xlu0 %v476
          %v478 = vpop.xlane.xlu0 %477
          %v479 = vsel %vm417, %v463, 0.0
          %480 = vadd.xlane.f32.xlu0 %v479
          %v481 = vpop.xlane.xlu0 %480
          %v482 = vsel %vm417, %v464, 0.0
          %483 = vadd.xlane.f32.xlu0 %v482
          %v484 = vpop.xlane.xlu0 %483
          %v485 = vsel %vm417, %v465, 0.0
          %486 = vadd.xlane.f32.xlu0 %v485
          %v487 = vpop.xlane.xlu0 %486
          %v488 = vsel %vm417, %v466, 0.0
          %489 = vadd.xlane.f32.xlu0 %v488
          %v490 = vpop.xlane.xlu0 %489
          %v491 = vmul.f32 %v469, %v442
          %v492 = vmul.f32 %v472, %v442
          %v493 = vmul.f32 %v475, %v442
          %v494 = vmul.f32 %v478, %v442
          %v495 = vmul.f32 %v481, %v442
          %v496 = vmul.f32 %v484, %v442
          %v497 = vmul.f32 %v487, %v442
          %v498 = vmul.f32 %v490, %v442
          %v499 = vadd.f32 %v491, 1e-05
          %v500 = vadd.f32 %v492, 1e-05
          %v501 = vadd.f32 %v493, 1e-05
          %v502 = vadd.f32 %v494, 1e-05
          %v503 = vadd.f32 %v495, 1e-05
          %v504 = vadd.f32 %v496, 1e-05
          %v505 = vadd.f32 %v497, 1e-05
          %v506 = vadd.f32 %v498, 1e-05
          %v507 = vrsqrt.pop %v499
          %v508 = vrsqrt.pop %v500
          %v509 = vrsqrt.pop %v501
          %v510 = vrsqrt.pop %v502
          %v511 = vrsqrt.pop %v503
          %v512 = vrsqrt.pop %v504
          %v513 = vrsqrt.pop %v505
          %v514 = vrsqrt.pop %v506
          %v515 = vmul.f32 %v451, %v507
          %v516 = vmul.f32 %v452, %v508
          %v517 = vmul.f32 %v453, %v509
          %v518 = vmul.f32 %v454, %v510
          %v519 = vmul.f32 %v455, %v511
          %v520 = vmul.f32 %v456, %v512
          %v521 = vmul.f32 %v457, %v513
          %v522 = vmul.f32 %v458, %v514
          %v523 = vld [vmem:[%s2] sm:$0x1]
          %v525 = vlaneseq
          %v526 = vshrl.u32 %v525, 7
          %v527 = vsub.s32 0, %v526
          %v528 = vrot.slane %v523, %v527
          %v530 = vmul.f32 %v515, %v528
          %v531 = vmul.f32 %v516, %v528
          %v532 = vmul.f32 %v517, %v528
          %v533 = vmul.f32 %v518, %v528
          %v534 = vmul.f32 %v519, %v528
          %v535 = vmul.f32 %v520, %v528
          %v536 = vmul.f32 %v521, %v528
          %v537 = vmul.f32 %v522, %v528
          %v538 = vld [vmem:[%s3] sm:$0x1]
          %v540 = vlaneseq
          %v541 = vshrl.u32 %v540, 7
          %v542 = vsub.s32 0, %v541
          %v543 = vrot.slane %v538, %v542
          %v545 = vadd.f32 %v530, %v543
          %v546 = vadd.f32 %v531, %v543
          %v547 = vadd.f32 %v532, %v543
          %v548 = vadd.f32 %v533, %v543
          %v549 = vadd.f32 %v534, %v543
          %v550 = vadd.f32 %v535, %v543
          %v551 = vadd.f32 %v536, %v543
          %v552 = vadd.f32 %v537, %v543
          %v553 = vld [vmem:[%s4] sm:$0xff]
          %v554 = vld [vmem:[%s4 + $0x8] sm:$0xff]
          %v555 = vld [vmem:[%s4 + $0x10] sm:$0xff]
          %v556 = vld [vmem:[%s4 + $0x18] sm:$0xff]
          %v558 = vsel %vm417, %v545, 0
          %v561 = vsel %vm417, %v546, 0
          %v564 = vsel %vm417, %v547, 0
          %v567 = vsel %vm417, %v548, 0
          %v570 = vsel %vm417, %v549, 0
          %v573 = vsel %vm417, %v550, 0
          %v576 = vsel %vm417, %v551, 0
          %v579 = vsel %vm417, %v552, 0
          %581 = vmatprep.subr.mxu0 0.0
          %582 = vmatpush1.msra.mxu0 %v553
          %583 = vmatprep.subr.mxu0 0.0
          %584 = vmatpush1.msra.mxu0 %v554
          %585 = vmatprep.subr.mxu0 0.0
          %586 = vmatpush1.msra.mxu0 %v555
          %587 = vmatprep.subr.mxu0 0.0
          %588 = vmatpush1.msra.mxu0 %v556
          %589 = vmatprep.subr.mxu0 0.0
          %590 = vmatpush1.msra.mxu0 0.0
          %591 = vmatprep.subr.mxu0 0.0
          %592 = vmatpush1.msra.mxu0 0.0
          %593 = vmatprep.subr.mxu0 0.0
          %594 = vmatpush1.msra.mxu0 0.0
          %595 = vmatprep.subr.mxu0 0.0
          %596 = vmatpush1.msra.mxu0 0.0
          %597 = vmatprep.subr.mxu0 0.0
          %598 = vmatpush1.msra.mxu0 0.0
          %599 = vmatprep.subr.mxu0 0.0
          %600 = vmatpush1.msra.mxu0 0.0
          %601 = vmatprep.subr.mxu0 0.0
          %602 = vmatpush1.msra.mxu0 0.0
          %603 = vmatprep.subr.mxu0 0.0
          %604 = vmatpush1.msra.mxu0 0.0
          %605 = vmatprep.subr.mxu0 0.0
          %606 = vmatpush1.msra.mxu0 0.0
          %607 = vmatprep.subr.mxu0 0.0
          %608 = vmatpush1.msra.mxu0 0.0
          %609 = vmatprep.subr.mxu0 0.0
          %610 = vmatpush1.msra.mxu0 0.0
          %611 = vmatprep.subr.mxu0 0.0
          %612 = vmatpush1.msra.mxu0 0.0
          %613 = vmatprep.subr.mxu0 0.0
          %614 = vmatpush1.msra.mxu0 0.0
          %615 = vmatprep.subr.mxu0 0.0
          %616 = vmatpush1.msra.mxu0 0.0
          %617 = vmatprep.subr.mxu0 0.0
          %618 = vmatpush1.msra.mxu0 0.0
          %619 = vmatprep.subr.mxu0 0.0
          %620 = vmatpush1.msra.mxu0 0.0
          %621 = vmatprep.subr.mxu0 0.0
          %622 = vmatpush1.msra.mxu0 0.0
          %623 = vmatprep.subr.mxu0 0.0
          %624 = vmatpush1.msra.mxu0 0.0
          %625 = vmatprep.subr.mxu0 0.0
          %626 = vmatpush1.msra.mxu0 0.0
          %627 = vmatprep.subr.mxu0 0.0
          %628 = vmatpush1.msra.mxu0 0.0
          %629 = vmatprep.subr.mxu0 0.0
          %630 = vmatpush1.msra.mxu0 0.0
          %631 = vmatprep.subr.mxu0 0.0
          %632 = vmatpush1.msra.mxu0 0.0
          %633 = vmatprep.subr.mxu0 0.0
          %634 = vmatpush1.msra.mxu0 0.0
          %635 = vmatprep.subr.mxu0 0.0
          %636 = vmatpush1.msra.mxu0 0.0
          %637 = vmatprep.subr.mxu0 0.0
          %638 = vmatpush1.msra.mxu0 0.0
          %639 = vmatprep.subr.mxu0 0.0
          %640 = vmatpush1.msra.mxu0 0.0
          %641 = vmatprep.subr.mxu0 0.0
          %642 = vmatpush1.msra.mxu0 0.0
          %643 = vmatprep.subr.mxu0 0.0
          %644 = vmatpush1.msra.mxu0 0.0
          %645 = vmatprep.mubr.f32.mxu0 0.0
          %646 = vmatmul.mubr.f32.gmra.mrb[0].mxu0 %v558
          %v647 = vpop.f32.mrb[0].mxu0
          %v648 = vadd.f32 0.0, %v647
          %v649 = vpop.f32.mrb[0].mxu0
          %650 = vmatprep.mubr.f32.mxu0 0.0
          %651 = vmatmul.mubr.f32.gmra.mrb[0].mxu0 %v561
          %v652 = vpop.f32.mrb[0].mxu0
          %v653 = vadd.f32 0.0, %v652
          %v654 = vpop.f32.mrb[0].mxu0
          %655 = vmatprep.mubr.f32.mxu0 0.0
          %656 = vmatmul.mubr.f32.gmra.mrb[0].mxu0 %v564
          %v657 = vpop.f32.mrb[0].mxu0
          %v658 = vadd.f32 0.0, %v657
          %v659 = vpop.f32.mrb[0].mxu0
          %660 = vmatprep.mubr.f32.mxu0 0.0
          %661 = vmatmul.mubr.f32.gmra.mrb[0].mxu0 %v567
          %v662 = vpop.f32.mrb[0].mxu0
          %v663 = vadd.f32 0.0, %v662
          %v664 = vpop.f32.mrb[0].mxu0
          %665 = vmatprep.mubr.f32.mxu0 0.0
          %666 = vmatmul.mubr.f32.gmra.mrb[0].mxu0 %v570
          %v667 = vpop.f32.mrb[0].mxu0
          %v668 = vadd.f32 0.0, %v667
          %v669 = vpop.f32.mrb[0].mxu0
          %670 = vmatprep.mubr.f32.mxu0 0.0
          %671 = vmatmul.mubr.f32.gmra.mrb[0].mxu0 %v573
          %v672 = vpop.f32.mrb[0].mxu0
          %v673 = vadd.f32 0.0, %v672
          %v674 = vpop.f32.mrb[0].mxu0
          %675 = vmatprep.mubr.f32.mxu0 0.0
          %676 = vmatmul.mubr.f32.gmra.mrb[0].mxu0 %v576
          %v677 = vpop.f32.mrb[0].mxu0
          %v678 = vadd.f32 0.0, %v677
          %v679 = vpop.f32.mrb[0].mxu0
          %680 = vmatprep.mubr.f32.mxu0 0.0
          %681 = vmatmul.mubr.f32.gmra.mrb[0].mxu0 %v579
          %v682 = vpop.f32.mrb[0].mxu0
          %v683 = vadd.f32 0.0, %v682
          %v684 = vpop.f32.mrb[0].mxu0
          %685 = vdwg.mxu0
          %v686 = vmul.f32 %v648, 0.17677669
          %v687 = vmul.f32 %v653, 0.17677669
          %v688 = vmul.f32 %v658, 0.17677669
          %v689 = vmul.f32 %v663, 0.17677669
          %v690 = vmul.f32 %v668, 0.17677669
          %v691 = vmul.f32 %v673, 0.17677669
          %v692 = vmul.f32 %v678, 0.17677669
          %v693 = vmul.f32 %v683, 0.17677669
          %694 = vst [vmem:[#allocation2] sm:$0xff] %v686
          %695 = vst [vmem:[#allocation2 + $0x8] sm:$0xff] %v687
          %696 = vst [vmem:[#allocation2 + $0x10] sm:$0xff] %v688
          %697 = vst [vmem:[#allocation2 + $0x18] sm:$0xff] %v689
          %698 = vst [vmem:[#allocation2 + $0x20] sm:$0xff] %v690
          %699 = vst [vmem:[#allocation2 + $0x28] sm:$0xff] %v691
          %700 = vst [vmem:[#allocation2 + $0x30] sm:$0xff] %v692
          %701 = vst [vmem:[#allocation2 + $0x38] sm:$0xff] %v693
          %vm702 = vcmask 7168
          %703 = vst.msk [vmem:[#allocation3] sm:$0xff] %vm702, -1e+30
          %704 = vst.msk [vmem:[#allocation3 + $0x8] sm:$0xff] %vm702, -1e+30
          %705 = vst.msk [vmem:[#allocation3 + $0x10] sm:$0xff] %vm702, -1e+30
          %706 = vst.msk [vmem:[#allocation3 + $0x18] sm:$0xff] %vm702, -1e+30
          %707 = vst.msk [vmem:[#allocation3 + $0x20] sm:$0xff] %vm702, -1e+30
          %708 = vst.msk [vmem:[#allocation3 + $0x28] sm:$0xff] %vm702, -1e+30
          %709 = vst.msk [vmem:[#allocation3 + $0x30] sm:$0xff] %vm702, -1e+30
          %710 = vst.msk [vmem:[#allocation3 + $0x38] sm:$0xff] %vm702, -1e+30
          %711 = vst.msk [vmem:[#allocation4] sm:$0xff] %vm702, 0.0
          %712 = vst.msk [vmem:[#allocation4 + $0x8] sm:$0xff] %vm702, 0.0
          %713 = vst.msk [vmem:[#allocation4 + $0x10] sm:$0xff] %vm702, 0.0
          %714 = vst.msk [vmem:[#allocation4 + $0x18] sm:$0xff] %vm702, 0.0
          %715 = vst.msk [vmem:[#allocation4 + $0x20] sm:$0xff] %vm702, 0.0
          %716 = vst.msk [vmem:[#allocation4 + $0x28] sm:$0xff] %vm702, 0.0
          %717 = vst.msk [vmem:[#allocation4 + $0x30] sm:$0xff] %vm702, 0.0
          %718 = vst.msk [vmem:[#allocation4 + $0x38] sm:$0xff] %vm702, 0.0
          %719 = vst [vmem:[#allocation5] sm:$0xff] 0.0
          %720 = vst [vmem:[#allocation5 + $0x8] sm:$0xff] 0.0
          %721 = vst [vmem:[#allocation5 + $0x10] sm:$0xff] 0.0
          %722 = vst [vmem:[#allocation5 + $0x18] sm:$0xff] 0.0
          %723 = vst [vmem:[#allocation5 + $0x20] sm:$0xff] 0.0
          %724 = vst [vmem:[#allocation5 + $0x28] sm:$0xff] 0.0
          %725 = vst [vmem:[#allocation5 + $0x30] sm:$0xff] 0.0
          %726 = vst [vmem:[#allocation5 + $0x38] sm:$0xff] 0.0
        $region60: #{tpu_custom_call.1} parent=55 // pred_fallthru
          _
        %v727 = vld [vmem:[%s402] sm:$0xff]
        %v728 = vld [vmem:[%s402 + $0x8] sm:$0xff]
        %v729 = vld [vmem:[%s402 + $0x10] sm:$0xff]
        %v730 = vld [vmem:[%s402 + $0x18] sm:$0xff]
        %v731 = vld [vmem:[%s402 + $0x20] sm:$0xff]
        %v732 = vld [vmem:[%s402 + $0x28] sm:$0xff]
        %v733 = vld [vmem:[%s402 + $0x30] sm:$0xff]
        %v734 = vld [vmem:[%s402 + $0x38] sm:$0xff]
        %vm735 = vcmask 261120
        %v736 = vsel %vm735, %v727, 0.0
        %737 = vadd.xlane.f32.xlu0 %v736
        %v738 = vpop.xlane.xlu0 %737
        %v739 = vsel %vm735, %v728, 0.0
        %740 = vadd.xlane.f32.xlu0 %v739
        %v741 = vpop.xlane.xlu0 %740
        %v742 = vsel %vm735, %v729, 0.0
        %743 = vadd.xlane.f32.xlu0 %v742
        %v744 = vpop.xlane.xlu0 %743
        %v745 = vsel %vm735, %v730, 0.0
        %746 = vadd.xlane.f32.xlu0 %v745
        %v747 = vpop.xlane.xlu0 %746
        %v748 = vsel %vm735, %v731, 0.0
        %749 = vadd.xlane.f32.xlu0 %v748
        %v750 = vpop.xlane.xlu0 %749
        %v751 = vsel %vm735, %v732, 0.0
        %752 = vadd.xlane.f32.xlu0 %v751
        %v753 = vpop.xlane.xlu0 %752
        %v754 = vsel %vm735, %v733, 0.0
        %755 = vadd.xlane.f32.xlu0 %v754
        %v756 = vpop.xlane.xlu0 %755
        %v757 = vsel %vm735, %v734, 0.0
        %758 = vadd.xlane.f32.xlu0 %v757
        %v759 = vpop.xlane.xlu0 %758
        %v760 = vrcp.pop 32.0
        %v761 = vmul.f32 %v738, %v760
        %v762 = vmul.f32 %v741, %v760
        %v763 = vmul.f32 %v744, %v760
        %v764 = vmul.f32 %v747, %v760
        %v765 = vmul.f32 %v750, %v760
        %v766 = vmul.f32 %v753, %v760
        %v767 = vmul.f32 %v756, %v760
        %v768 = vmul.f32 %v759, %v760
        %v769 = vsub.f32 %v727, %v761
        %v770 = vsub.f32 %v728, %v762
        %v771 = vsub.f32 %v729, %v763
        %v772 = vsub.f32 %v730, %v764
        %v773 = vsub.f32 %v731, %v765
        %v774 = vsub.f32 %v732, %v766
        %v775 = vsub.f32 %v733, %v767
        %v776 = vsub.f32 %v734, %v768
        %v777 = vmul.f32 %v769, %v769
        %v778 = vmul.f32 %v770, %v770
        %v779 = vmul.f32 %v771, %v771
        %v780 = vmul.f32 %v772, %v772
        %v781 = vmul.f32 %v773, %v773
        %v782 = vmul.f32 %v774, %v774
        %v783 = vmul.f32 %v775, %v775
        %v784 = vmul.f32 %v776, %v776
        %v785 = vsel %vm735, %v777, 0.0
        %786 = vadd.xlane.f32.xlu0 %v785
        %v787 = vpop.xlane.xlu0 %786
        %v788 = vsel %vm735, %v778, 0.0
        %789 = vadd.xlane.f32.xlu0 %v788
        %v790 = vpop.xlane.xlu0 %789
        %v791 = vsel %vm735, %v779, 0.0
        %792 = vadd.xlane.f32.xlu0 %v791
        %v793 = vpop.xlane.xlu0 %792
        %v794 = vsel %vm735, %v780, 0.0
        %795 = vadd.xlane.f32.xlu0 %v794
        %v796 = vpop.xlane.xlu0 %795
        %v797 = vsel %vm735, %v781, 0.0
        %798 = vadd.xlane.f32.xlu0 %v797
        %v799 = vpop.xlane.xlu0 %798
        %v800 = vsel %vm735, %v782, 0.0
        %801 = vadd.xlane.f32.xlu0 %v800
        %v802 = vpop.xlane.xlu0 %801
        %v803 = vsel %vm735, %v783, 0.0
        %804 = vadd.xlane.f32.xlu0 %v803
        %v805 = vpop.xlane.xlu0 %804
        %v806 = vsel %vm735, %v784, 0.0
        %807 = vadd.xlane.f32.xlu0 %v806
        %v808 = vpop.xlane.xlu0 %807
        %v809 = vmul.f32 %v787, %v760
        %v810 = vmul.f32 %v790, %v760
        %v811 = vmul.f32 %v793, %v760
        %v812 = vmul.f32 %v796, %v760
        %v813 = vmul.f32 %v799, %v760
        %v814 = vmul.f32 %v802, %v760
        %v815 = vmul.f32 %v805, %v760
        %v816 = vmul.f32 %v808, %v760
        %v817 = vadd.f32 %v809, 1e-05
        %v818 = vadd.f32 %v810, 1e-05
        %v819 = vadd.f32 %v811, 1e-05
        %v820 = vadd.f32 %v812, 1e-05
        %v821 = vadd.f32 %v813, 1e-05
        %v822 = vadd.f32 %v814, 1e-05
        %v823 = vadd.f32 %v815, 1e-05
        %v824 = vadd.f32 %v816, 1e-05
        %v825 = vrsqrt.pop %v817
        %v826 = vrsqrt.pop %v818
        %v827 = vrsqrt.pop %v819
        %v828 = vrsqrt.pop %v820
        %v829 = vrsqrt.pop %v821
        %v830 = vrsqrt.pop %v822
        %v831 = vrsqrt.pop %v823
        %v832 = vrsqrt.pop %v824
        %v833 = vmul.f32 %v769, %v825
        %v834 = vmul.f32 %v770, %v826
        %v835 = vmul.f32 %v771, %v827
        %v836 = vmul.f32 %v772, %v828
        %v837 = vmul.f32 %v773, %v829
        %v838 = vmul.f32 %v774, %v830
        %v839 = vmul.f32 %v775, %v831
        %v840 = vmul.f32 %v776, %v832
        %v841 = vld [vmem:[%s2] sm:$0x1]
        %v843 = vlaneseq
        %v844 = vshrl.u32 %v843, 7
        %v845 = vsub.s32 0, %v844
        %v846 = vrot.slane %v841, %v845
        %v848 = vmul.f32 %v833, %v846
        %v849 = vmul.f32 %v834, %v846
        %v850 = vmul.f32 %v835, %v846
        %v851 = vmul.f32 %v836, %v846
        %v852 = vmul.f32 %v837, %v846
        %v853 = vmul.f32 %v838, %v846
        %v854 = vmul.f32 %v839, %v846
        %v855 = vmul.f32 %v840, %v846
        %v856 = vld [vmem:[%s3] sm:$0x1]
        %v858 = vlaneseq
        %v859 = vshrl.u32 %v858, 7
        %v860 = vsub.s32 0, %v859
        %v861 = vrot.slane %v856, %v860
        %v863 = vadd.f32 %v848, %v861
        %v864 = vadd.f32 %v849, %v861
        %v865 = vadd.f32 %v850, %v861
        %v866 = vadd.f32 %v851, %v861
        %v867 = vadd.f32 %v852, %v861
        %v868 = vadd.f32 %v853, %v861
        %v869 = vadd.f32 %v854, %v861
        %v870 = vadd.f32 %v855, %v861
        %v871 = vld [vmem:[%s5] sm:$0xff]
        %v872 = vld [vmem:[%s5 + $0x8] sm:$0xff]
        %v873 = vld [vmem:[%s5 + $0x10] sm:$0xff]
        %v874 = vld [vmem:[%s5 + $0x18] sm:$0xff]
        %v876 = vsel %vm735, %v863, 0
        %v879 = vsel %vm735, %v864, 0
        %v882 = vsel %vm735, %v865, 0
        %v885 = vsel %vm735, %v866, 0
        %v888 = vsel %vm735, %v867, 0
        %v891 = vsel %vm735, %v868, 0
        %v894 = vsel %vm735, %v869, 0
        %v897 = vsel %vm735, %v870, 0
        %899 = vmatprep.subr.mxu0 0.0
        %900 = vmatpush1.msra.mxu0 %v871
        %901 = vmatprep.subr.mxu0 0.0
        %902 = vmatpush1.msra.mxu0 %v872
        %903 = vmatprep.subr.mxu0 0.0
        %904 = vmatpush1.msra.mxu0 %v873
        %905 = vmatprep.subr.mxu0 0.0
        %906 = vmatpush1.msra.mxu0 %v874
        %907 = vmatprep.subr.mxu0 0.0
        %908 = vmatpush1.msra.mxu0 0.0
        %909 = vmatprep.subr.mxu0 0.0
        %910 = vmatpush1.msra.mxu0 0.0
        %911 = vmatprep.subr.mxu0 0.0
        %912 = vmatpush1.msra.mxu0 0.0
        %913 = vmatprep.subr.mxu0 0.0
        %914 = vmatpush1.msra.mxu0 0.0
        %915 = vmatprep.subr.mxu0 0.0
        %916 = vmatpush1.msra.mxu0 0.0
        %917 = vmatprep.subr.mxu0 0.0
        %918 = vmatpush1.msra.mxu0 0.0
        %919 = vmatprep.subr.mxu0 0.0
        %920 = vmatpush1.msra.mxu0 0.0
        %921 = vmatprep.subr.mxu0 0.0
        %922 = vmatpush1.msra.mxu0 0.0
        %923 = vmatprep.subr.mxu0 0.0
        %924 = vmatpush1.msra.mxu0 0.0
        %925 = vmatprep.subr.mxu0 0.0
        %926 = vmatpush1.msra.mxu0 0.0
        %927 = vmatprep.subr.mxu0 0.0
        %928 = vmatpush1.msra.mxu0 0.0
        %929 = vmatprep.subr.mxu0 0.0
        %930 = vmatpush1.msra.mxu0 0.0
        %931 = vmatprep.subr.mxu0 0.0
        %932 = vmatpush1.msra.mxu0 0.0
        %933 = vmatprep.subr.mxu0 0.0
        %934 = vmatpush1.msra.mxu0 0.0
        %935 = vmatprep.subr.mxu0 0.0
        %936 = vmatpush1.msra.mxu0 0.0
        %937 = vmatprep.subr.mxu0 0.0
        %938 = vmatpush1.msra.mxu0 0.0
        %939 = vmatprep.subr.mxu0 0.0
        %940 = vmatpush1.msra.mxu0 0.0
        %941 = vmatprep.subr.mxu0 0.0
        %942 = vmatpush1.msra.mxu0 0.0
        %943 = vmatprep.subr.mxu0 0.0
        %944 = vmatpush1.msra.mxu0 0.0
        %945 = vmatprep.subr.mxu0 0.0
        %946 = vmatpush1.msra.mxu0 0.0
        %947 = vmatprep.subr.mxu0 0.0
        %948 = vmatpush1.msra.mxu0 0.0
        %949 = vmatprep.subr.mxu0 0.0
        %950 = vmatpush1.msra.mxu0 0.0
        %951 = vmatprep.subr.mxu0 0.0
        %952 = vmatpush1.msra.mxu0 0.0
        %953 = vmatprep.subr.mxu0 0.0
        %954 = vmatpush1.msra.mxu0 0.0
        %955 = vmatprep.subr.mxu0 0.0
        %956 = vmatpush1.msra.mxu0 0.0
        %957 = vmatprep.subr.mxu0 0.0
        %958 = vmatpush1.msra.mxu0 0.0
        %959 = vmatprep.subr.mxu0 0.0
        %960 = vmatpush1.msra.mxu0 0.0
        %961 = vmatprep.subr.mxu0 0.0
        %962 = vmatpush1.msra.mxu0 0.0
        %963 = vmatprep.mubr.f32.mxu0 0.0
        %964 = vmatmul.mubr.f32.gmra.mrb[0].mxu0 %v876
        %v965 = vpop.f32.mrb[0].mxu0
        %v966 = vadd.f32 0.0, %v965
        %v967 = vpop.f32.mrb[0].mxu0
        %968 = vmatprep.mubr.f32.mxu0 0.0
        %969 = vmatmul.mubr.f32.gmra.mrb[0].mxu0 %v879
        %v970 = vpop.f32.mrb[0].mxu0
        %v971 = vadd.f32 0.0, %v970
        %v972 = vpop.f32.mrb[0].mxu0
        %973 = vmatprep.mubr.f32.mxu0 0.0
        %974 = vmatmul.mubr.f32.gmra.mrb[0].mxu0 %v882
        %v975 = vpop.f32.mrb[0].mxu0
        %v976 = vadd.f32 0.0, %v975
        %v977 = vpop.f32.mrb[0].mxu0
        %978 = vmatprep.mubr.f32.mxu0 0.0
        %979 = vmatmul.mubr.f32.gmra.mrb[0].mxu0 %v885
        %v980 = vpop.f32.mrb[0].mxu0
        %v981 = vadd.f32 0.0, %v980
        %v982 = vpop.f32.mrb[0].mxu0
        %983 = vmatprep.mubr.f32.mxu0 0.0
        %984 = vmatmul.mubr.f32.gmra.mrb[0].mxu0 %v888
        %v985 = vpop.f32.mrb[0].mxu0
        %v986 = vadd.f32 0.0, %v985
        %v987 = vpop.f32.mrb[0].mxu0
        %988 = vmatprep.mubr.f32.mxu0 0.0
        %989 = vmatmul.mubr.f32.gmra.mrb[0].mxu0 %v891
        %v990 = vpop.f32.mrb[0].mxu0
        %v991 = vadd.f32 0.0, %v990
        %v992 = vpop.f32.mrb[0].mxu0
        %993 = vmatprep.mubr.f32.mxu0 0.0
        %994 = vmatmul.mubr.f32.gmra.mrb[0].mxu0 %v894
        %v995 = vpop.f32.mrb[0].mxu0
        %v996 = vadd.f32 0.0, %v995
        %v997 = vpop.f32.mrb[0].mxu0
        %998 = vmatprep.mubr.f32.mxu0 0.0
        %999 = vmatmul.mubr.f32.gmra.mrb[0].mxu0 %v897
        %v1000 = vpop.f32.mrb[0].mxu0
        %v1001 = vadd.f32 0.0, %v1000
        %v1002 = vpop.f32.mrb[0].mxu0
        %1003 = vdwg.mxu0
        %v1004 = vld [vmem:[%s6] sm:$0xff]
        %v1005 = vld [vmem:[%s6 + $0x8] sm:$0xff]
        %v1006 = vld [vmem:[%s6 + $0x10] sm:$0xff]
        %v1007 = vld [vmem:[%s6 + $0x18] sm:$0xff]
        %1008 = vmatprep.subr.mxu0 0.0
        %1009 = vmatpush1.msra.mxu0 %v1004
        %1010 = vmatprep.subr.mxu0 0.0
        %1011 = vmatpush1.msra.mxu0 %v1005
        %1012 = vmatprep.subr.mxu0 0.0
        %1013 = vmatpush1.msra.mxu0 %v1006
        %1014 = vmatprep.subr.mxu0 0.0
        %1015 = vmatpush1.msra.mxu0 %v1007
        %1016 = vmatprep.subr.mxu0 0.0
        %1017 = vmatpush1.msra.mxu0 0.0
        %1018 = vmatprep.subr.mxu0 0.0
        %1019 = vmatpush1.msra.mxu0 0.0
        %1020 = vmatprep.subr.mxu0 0.0
        %1021 = vmatpush1.msra.mxu0 0.0
        %1022 = vmatprep.subr.mxu0 0.0
        %1023 = vmatpush1.msra.mxu0 0.0
        %1024 = vmatprep.subr.mxu0 0.0
        %1025 = vmatpush1.msra.mxu0 0.0
        %1026 = vmatprep.subr.mxu0 0.0
        %1027 = vmatpush1.msra.mxu0 0.0
        %1028 = vmatprep.subr.mxu0 0.0
        %1029 = vmatpush1.msra.mxu0 0.0
        %1030 = vmatprep.subr.mxu0 0.0
        %1031 = vmatpush1.msra.mxu0 0.0
        %1032 = vmatprep.subr.mxu0 0.0
        %1033 = vmatpush1.msra.mxu0 0.0
        %1034 = vmatprep.subr.mxu0 0.0
        %1035 = vmatpush1.msra.mxu0 0.0
        %1036 = vmatprep.subr.mxu0 0.0
        %1037 = vmatpush1.msra.mxu0 0.0
        %1038 = vmatprep.subr.mxu0 0.0
        %1039 = vmatpush1.msra.mxu0 0.0
        %1040 = vmatprep.subr.mxu0 0.0
        %1041 = vmatpush1.msra.mxu0 0.0
        %1042 = vmatprep.subr.mxu0 0.0
        %1043 = vmatpush1.msra.mxu0 0.0
        %1044 = vmatprep.subr.mxu0 0.0
        %1045 = vmatpush1.msra.mxu0 0.0
        %1046 = vmatprep.subr.mxu0 0.0
        %1047 = vmatpush1.msra.mxu0 0.0
        %1048 = vmatprep.subr.mxu0 0.0
        %1049 = vmatpush1.msra.mxu0 0.0
        %1050 = vmatprep.subr.mxu0 0.0
        %1051 = vmatpush1.msra.mxu0 0.0
        %1052 = vmatprep.subr.mxu0 0.0
        %1053 = vmatpush1.msra.mxu0 0.0
        %1054 = vmatprep.subr.mxu0 0.0
        %1055 = vmatpush1.msra.mxu0 0.0
        %1056 = vmatprep.subr.mxu0 0.0
        %1057 = vmatpush1.msra.mxu0 0.0
        %1058 = vmatprep.subr.mxu0 0.0
        %1059 = vmatpush1.msra.mxu0 0.0
        %1060 = vmatprep.subr.mxu0 0.0
        %1061 = vmatpush1.msra.mxu0 0.0
        %1062 = vmatprep.subr.mxu0 0.0
        %1063 = vmatpush1.msra.mxu0 0.0
        %1064 = vmatprep.subr.mxu0 0.0
        %1065 = vmatpush1.msra.mxu0 0.0
        %1066 = vmatprep.subr.mxu0 0.0
        %1067 = vmatpush1.msra.mxu0 0.0
        %1068 = vmatprep.subr.mxu0 0.0
        %1069 = vmatpush1.msra.mxu0 0.0
        %1070 = vmatprep.subr.mxu0 0.0
        %1071 = vmatpush1.msra.mxu0 0.0
        %1072 = vmatprep.mubr.f32.mxu0 0.0
        %1073 = vmatmul.mubr.f32.gmra.mrb[0].mxu0 %v876
        %v1074 = vpop.f32.mrb[0].mxu0
        %v1075 = vadd.f32 0.0, %v1074
        %v1076 = vpop.f32.mrb[0].mxu0
        %1077 = vmatprep.mubr.f32.mxu0 0.0
        %1078 = vmatmul.mubr.f32.gmra.mrb[0].mxu0 %v879
        %v1079 = vpop.f32.mrb[0].mxu0
        %v1080 = vadd.f32 0.0, %v1079
        %v1081 = vpop.f32.mrb[0].mxu0
        %1082 = vmatprep.mubr.f32.mxu0 0.0
        %1083 = vmatmul.mubr.f32.gmra.mrb[0].mxu0 %v882
        %v1084 = vpop.f32.mrb[0].mxu0
        %v1085 = vadd.f32 0.0, %v1084
        %v1086 = vpop.f32.mrb[0].mxu0
        %1087 = vmatprep.mubr.f32.mxu0 0.0
        %1088 = vmatmul.mubr.f32.gmra.mrb[0].mxu0 %v885
        %v1089 = vpop.f32.mrb[0].mxu0
        %v1090 = vadd.f32 0.0, %v1089
        %v1091 = vpop.f32.mrb[0].mxu0
        %1092 = vmatprep.mubr.f32.mxu0 0.0
        %1093 = vmatmul.mubr.f32.gmra.mrb[0].mxu0 %v888
        %v1094 = vpop.f32.mrb[0].mxu0
        %v1095 = vadd.f32 0.0, %v1094
        %v1096 = vpop.f32.mrb[0].mxu0
        %1097 = vmatprep.mubr.f32.mxu0 0.0
        %1098 = vmatmul.mubr.f32.gmra.mrb[0].mxu0 %v891
        %v1099 = vpop.f32.mrb[0].mxu0
        %v1100 = vadd.f32 0.0, %v1099
        %v1101 = vpop.f32.mrb[0].mxu0
        %1102 = vmatprep.mubr.f32.mxu0 0.0
        %1103 = vmatmul.mubr.f32.gmra.mrb[0].mxu0 %v894
        %v1104 = vpop.f32.mrb[0].mxu0
        %v1105 = vadd.f32 0.0, %v1104
        %v1106 = vpop.f32.mrb[0].mxu0
        %1107 = vmatprep.mubr.f32.mxu0 0.0
        %1108 = vmatmul.mubr.f32.gmra.mrb[0].mxu0 %v897
        %v1109 = vpop.f32.mrb[0].mxu0
        %v1110 = vadd.f32 0.0, %v1109
        %v1111 = vpop.f32.mrb[0].mxu0
        %1112 = vdwg.mxu0
        %v1113 = vld [vmem:[#allocation2] sm:$0xff]
        %v1114 = vld [vmem:[#allocation2 + $0x8] sm:$0xff]
        %v1115 = vld [vmem:[#allocation2 + $0x10] sm:$0xff]
        %v1116 = vld [vmem:[#allocation2 + $0x18] sm:$0xff]
        %v1117 = vld [vmem:[#allocation2 + $0x20] sm:$0xff]
        %v1118 = vld [vmem:[#allocation2 + $0x28] sm:$0xff]
        %v1119 = vld [vmem:[#allocation2 + $0x30] sm:$0xff]
        %v1120 = vld [vmem:[#allocation2 + $0x38] sm:$0xff]
        %1121 = vmatprep.subr.mxu0 0.0
        %1122 = vmatpush1.xpose.msra.mxu0 %v966
        %1123 = vmatprep.subr.mxu0 0.0
        %1124 = vmatpush1.xpose.msra.mxu0 %v971
        %1125 = vmatprep.subr.mxu0 0.0
        %1126 = vmatpush1.xpose.msra.mxu0 %v976
        %1127 = vmatprep.subr.mxu0 0.0
        %1128 = vmatpush1.xpose.msra.mxu0 %v981
        %1129 = vmatprep.subr.mxu0 0.0
        %1130 = vmatpush1.xpose.msra.mxu0 %v986
        %1131 = vmatprep.subr.mxu0 0.0
        %1132 = vmatpush1.xpose.msra.mxu0 %v991
        %1133 = vmatprep.subr.mxu0 0.0
        %1134 = vmatpush1.xpose.msra.mxu0 %v996
        %1135 = vmatprep.subr.mxu0 0.0
        %1136 = vmatpush1.xpose.msra.mxu0 %v1001
        %1137 = vmatprep.subr.mxu0 0.0
        %1138 = vmatpush1.xpose.msra.mxu0 0.0
        %1139 = vmatprep.subr.mxu0 0.0
        %1140 = vmatpush1.xpose.msra.mxu0 0.0
        %1141 = vmatprep.subr.mxu0 0.0
        %1142 = vmatpush1.xpose.msra.mxu0 0.0
        %1143 = vmatprep.subr.mxu0 0.0
        %1144 = vmatpush1.xpose.msra.mxu0 0.0
        %1145 = vmatprep.subr.mxu0 0.0
        %1146 = vmatpush1.xpose.msra.mxu0 0.0
        %1147 = vmatprep.subr.mxu0 0.0
        %1148 = vmatpush1.xpose.msra.mxu0 0.0
        %1149 = vmatprep.subr.mxu0 0.0
        %1150 = vmatpush1.xpose.msra.mxu0 0.0
        %1151 = vmatprep.subr.mxu0 0.0
        %1152 = vmatpush1.xpose.msra.mxu0 0.0
        %1153 = vmatprep.subr.mxu0 0.0
        %1154 = vmatpush1.xpose.msra.mxu0 0.0
        %1155 = vmatprep.subr.mxu0 0.0
        %1156 = vmatpush1.xpose.msra.mxu0 0.0
        %1157 = vmatprep.subr.mxu0 0.0
        %1158 = vmatpush1.xpose.msra.mxu0 0.0
        %1159 = vmatprep.subr.mxu0 0.0
        %1160 = vmatpush1.xpose.msra.mxu0 0.0
        %1161 = vmatprep.subr.mxu0 0.0
        %1162 = vmatpush1.xpose.msra.mxu0 0.0
        %1163 = vmatprep.subr.mxu0 0.0
        %1164 = vmatpush1.xpose.msra.mxu0 0.0
        %1165 = vmatprep.subr.mxu0 0.0
        %1166 = vmatpush1.xpose.msra.mxu0 0.0
        %1167 = vmatprep.subr.mxu0 0.0
        %1168 = vmatpush1.xpose.msra.mxu0 0.0
        %1169 = vmatprep.subr.mxu0 0.0
        %1170 = vmatpush1.xpose.msra.mxu0 0.0
        %1171 = vmatprep.subr.mxu0 0.0
        %1172 = vmatpush1.xpose.msra.mxu0 0.0
        %1173 = vmatprep.subr.mxu0 0.0
        %1174 = vmatpush1.xpose.msra.mxu0 0.0
        %1175 = vmatprep.subr.mxu0 0.0
        %1176 = vmatpush1.xpose.msra.mxu0 0.0
        %1177 = vmatprep.subr.mxu0 0.0
        %1178 = vmatpush1.xpose.msra.mxu0 0.0
        %1179 = vmatprep.subr.mxu0 0.0
        %1180 = vmatpush1.xpose.msra.mxu0 0.0
        %1181 = vmatprep.subr.mxu0 0.0
        %1182 = vmatpush1.xpose.msra.mxu0 0.0
        %1183 = vmatprep.subr.mxu0 0.0
        %1184 = vmatpush1.xpose.msra.mxu0 0.0
        %1185 = vmatprep.mubr.f32.mxu0 0.0
        %1186 = vmatmul.mubr.f32.gmra.mrb[0].mxu0 %v1113
        %v1187 = vpop.f32.mrb[0].mxu0
        %v1188 = vadd.f32 0.0, %v1187
        %v1189 = vpop.f32.mrb[0].mxu0
        %1190 = vmatprep.mubr.f32.mxu0 0.0
        %1191 = vmatmul.mubr.f32.gmra.mrb[0].mxu0 %v1114
        %v1192 = vpop.f32.mrb[0].mxu0
        %v1193 = vadd.f32 0.0, %v1192
        %v1194 = vpop.f32.mrb[0].mxu0
        %1195 = vmatprep.mubr.f32.mxu0 0.0
        %1196 = vmatmul.mubr.f32.gmra.mrb[0].mxu0 %v1115
        %v1197 = vpop.f32.mrb[0].mxu0
        %v1198 = vadd.f32 0.0, %v1197
        %v1199 = vpop.f32.mrb[0].mxu0
        %1200 = vmatprep.mubr.f32.mxu0 0.0
        %1201 = vmatmul.mubr.f32.gmra.mrb[0].mxu0 %v1116
        %v1202 = vpop.f32.mrb[0].mxu0
        %v1203 = vadd.f32 0.0, %v1202
        %v1204 = vpop.f32.mrb[0].mxu0
        %1205 = vmatprep.mubr.f32.mxu0 0.0
        %1206 = vmatmul.mubr.f32.gmra.mrb[0].mxu0 %v1117
        %v1207 = vpop.f32.mrb[0].mxu0
        %v1208 = vadd.f32 0.0, %v1207
        %v1209 = vpop.f32.mrb[0].mxu0
        %1210 = vmatprep.mubr.f32.mxu0 0.0
        %1211 = vmatmul.mubr.f32.gmra.mrb[0].mxu0 %v1118
        %v1212 = vpop.f32.mrb[0].mxu0
        %v1213 = vadd.f32 0.0, %v1212
        %v1214 = vpop.f32.mrb[0].mxu0
        %1215 = vmatprep.mubr.f32.mxu0 0.0
        %1216 = vmatmul.mubr.f32.gmra.mrb[0].mxu0 %v1119
        %v1217 = vpop.f32.mrb[0].mxu0
        %v1218 = vadd.f32 0.0, %v1217
        %v1219 = vpop.f32.mrb[0].mxu0
        %1220 = vmatprep.mubr.f32.mxu0 0.0
        %1221 = vmatmul.mubr.f32.gmra.mrb[0].mxu0 %v1120
        %v1222 = vpop.f32.mrb[0].mxu0
        %v1223 = vadd.f32 0.0, %v1222
        %v1224 = vpop.f32.mrb[0].mxu0
        %1225 = vdwg.mxu0
        %v1226 = vld [vmem:[#allocation3] sm:$0xff]
        %v1227 = vld [vmem:[#allocation3 + $0x8] sm:$0xff]
        %v1228 = vld [vmem:[#allocation3 + $0x10] sm:$0xff]
        %v1229 = vld [vmem:[#allocation3 + $0x18] sm:$0xff]
        %v1230 = vld [vmem:[#allocation3 + $0x20] sm:$0xff]
        %v1231 = vld [vmem:[#allocation3 + $0x28] sm:$0xff]
        %v1232 = vld [vmem:[#allocation3 + $0x30] sm:$0xff]
        %v1233 = vld [vmem:[#allocation3 + $0x38] sm:$0xff]
        %vm1234 = vcmask 523264
        %v1235 = vsel %vm1234, %v1188, -inf
        %1236 = vmax.xlane.f32.xlu0 %v1235
        %v1237 = vpop.xlane.xlu0 %1236
        %v1238 = vsel %vm1234, %v1193, -inf
        %1239 = vmax.xlane.f32.xlu0 %v1238
        %v1240 = vpop.xlane.xlu0 %1239
        %v1241 = vsel %vm1234, %v1198, -inf
        %1242 = vmax.xlane.f32.xlu0 %v1241
        %v1243 = vpop.xlane.xlu0 %1242
        %v1244 = vsel %vm1234, %v1203, -inf
        %1245 = vmax.xlane.f32.xlu0 %v1244
        %v1246 = vpop.xlane.xlu0 %1245
        %v1247 = vsel %vm1234, %v1208, -inf
        %1248 = vmax.xlane.f32.xlu0 %v1247
        %v1249 = vpop.xlane.xlu0 %1248
        %v1250 = vsel %vm1234, %v1213, -inf
        %1251 = vmax.xlane.f32.xlu0 %v1250
        %v1252 = vpop.xlane.xlu0 %1251
        %v1253 = vsel %vm1234, %v1218, -inf
        %1254 = vmax.xlane.f32.xlu0 %v1253
        %v1255 = vpop.xlane.xlu0 %1254
        %v1256 = vsel %vm1234, %v1223, -inf
        %1257 = vmax.xlane.f32.xlu0 %v1256
        %v1258 = vpop.xlane.xlu0 %1257
        %v1259 = vmax.f32 %v1226, %v1237
        %v1260 = vmax.f32 %v1227, %v1240
        %v1261 = vmax.f32 %v1228, %v1243
        %v1262 = vmax.f32 %v1229, %v1246
        %v1263 = vmax.f32 %v1230, %v1249
        %v1264 = vmax.f32 %v1231, %v1252
        %v1265 = vmax.f32 %v1232, %v1255
        %v1266 = vmax.f32 %v1233, %v1258
        %v1267 = vsub.f32 %v1226, %v1259
        %v1268 = vsub.f32 %v1227, %v1260
        %v1269 = vsub.f32 %v1228, %v1261
        %v1270 = vsub.f32 %v1229, %v1262
        %v1271 = vsub.f32 %v1230, %v1263
        %v1272 = vsub.f32 %v1231, %v1264
        %v1273 = vsub.f32 %v1232, %v1265
        %v1274 = vsub.f32 %v1233, %v1266
        %v1275 = vmul.f32 %v1267, 1.442695
        %v1276 = vpow.pop %v1275
        %v1277 = vmul.f32 %v1268, 1.442695
        %v1278 = vpow.pop %v1277
        %v1279 = vmul.f32 %v1269, 1.442695
        %v1280 = vpow.pop %v1279
        %v1281 = vmul.f32 %v1270, 1.442695
        %v1282 = vpow.pop %v1281
        %v1283 = vmul.f32 %v1271, 1.442695
        %v1284 = vpow.pop %v1283
        %v1285 = vmul.f32 %v1272, 1.442695
        %v1286 = vpow.pop %v1285
        %v1287 = vmul.f32 %v1273, 1.442695
        %v1288 = vpow.pop %v1287
        %v1289 = vmul.f32 %v1274, 1.442695
        %v1290 = vpow.pop %v1289
        %1292 = vset.pattern.permute.xlu0 0
        %1293 = vperm.xlu0 %1292, %v1259
        %v1294 = vpop.permute.xlu0 %1293
        %1297 = vset.pattern.permute.xlu0 0
        %1298 = vperm.xlu0 %1297, %v1260
        %v1299 = vpop.permute.xlu0 %1298
        %1302 = vset.pattern.permute.xlu0 0
        %1303 = vperm.xlu0 %1302, %v1261
        %v1304 = vpop.permute.xlu0 %1303
        %1307 = vset.pattern.permute.xlu0 0
        %1308 = vperm.xlu0 %1307, %v1262
        %v1309 = vpop.permute.xlu0 %1308
        %1312 = vset.pattern.permute.xlu0 0
        %1313 = vperm.xlu0 %1312, %v1263
        %v1314 = vpop.permute.xlu0 %1313
        %1317 = vset.pattern.permute.xlu0 0
        %1318 = vperm.xlu0 %1317, %v1264
        %v1319 = vpop.permute.xlu0 %1318
        %1322 = vset.pattern.permute.xlu0 0
        %1323 = vperm.xlu0 %1322, %v1265
        %v1324 = vpop.permute.xlu0 %1323
        %1327 = vset.pattern.permute.xlu0 0
        %1328 = vperm.xlu0 %1327, %v1266
        %v1329 = vpop.permute.xlu0 %1328
        %v1331 = vsub.f32 %v1188, %v1294
        %v1332 = vsub.f32 %v1193, %v1299
        %v1333 = vsub.f32 %v1198, %v1304
        %v1334 = vsub.f32 %v1203, %v1309
        %v1335 = vsub.f32 %v1208, %v1314
        %v1336 = vsub.f32 %v1213, %v1319
        %v1337 = vsub.f32 %v1218, %v1324
        %v1338 = vsub.f32 %v1223, %v1329
        %v1339 = vmul.f32 %v1331, 1.442695
        %v1340 = vpow.pop %v1339
        %v1341 = vmul.f32 %v1332, 1.442695
        %v1342 = vpow.pop %v1341
        %v1343 = vmul.f32 %v1333, 1.442695
        %v1344 = vpow.pop %v1343
        %v1345 = vmul.f32 %v1334, 1.442695
        %v1346 = vpow.pop %v1345
        %v1347 = vmul.f32 %v1335, 1.442695
        %v1348 = vpow.pop %v1347
        %v1349 = vmul.f32 %v1336, 1.442695
        %v1350 = vpow.pop %v1349
        %v1351 = vmul.f32 %v1337, 1.442695
        %v1352 = vpow.pop %v1351
        %v1353 = vmul.f32 %v1338, 1.442695
        %v1354 = vpow.pop %v1353
        %v1355 = vld [vmem:[#allocation4] sm:$0xff]
        %v1356 = vld [vmem:[#allocation4 + $0x8] sm:$0xff]
        %v1357 = vld [vmem:[#allocation4 + $0x10] sm:$0xff]
        %v1358 = vld [vmem:[#allocation4 + $0x18] sm:$0xff]
        %v1359 = vld [vmem:[#allocation4 + $0x20] sm:$0xff]
        %v1360 = vld [vmem:[#allocation4 + $0x28] sm:$0xff]
        %v1361 = vld [vmem:[#allocation4 + $0x30] sm:$0xff]
        %v1362 = vld [vmem:[#allocation4 + $0x38] sm:$0xff]
        %v1363 = vmul.f32 %v1276, %v1355
        %v1364 = vmul.f32 %v1278, %v1356
        %v1365 = vmul.f32 %v1280, %v1357
        %v1366 = vmul.f32 %v1282, %v1358
        %v1367 = vmul.f32 %v1284, %v1359
        %v1368 = vmul.f32 %v1286, %v1360
        %v1369 = vmul.f32 %v1288, %v1361
        %v1370 = vmul.f32 %v1290, %v1362
        %v1371 = vsel %vm1234, %v1340, 0.0
        %1372 = vadd.xlane.f32.xlu0 %v1371
        %v1373 = vpop.xlane.xlu0 %1372
        %v1374 = vsel %vm1234, %v1342, 0.0
        %1375 = vadd.xlane.f32.xlu0 %v1374
        %v1376 = vpop.xlane.xlu0 %1375
        %v1377 = vsel %vm1234, %v1344, 0.0
        %1378 = vadd.xlane.f32.xlu0 %v1377
        %v1379 = vpop.xlane.xlu0 %1378
        %v1380 = vsel %vm1234, %v1346, 0.0
        %1381 = vadd.xlane.f32.xlu0 %v1380
        %v1382 = vpop.xlane.xlu0 %1381
        %v1383 = vsel %vm1234, %v1348, 0.0
        %1384 = vadd.xlane.f32.xlu0 %v1383
        %v1385 = vpop.xlane.xlu0 %1384
        %v1386 = vsel %vm1234, %v1350, 0.0
        %1387 = vadd.xlane.f32.xlu0 %v1386
        %v1388 = vpop.xlane.xlu0 %1387
        %v1389 = vsel %vm1234, %v1352, 0.0
        %1390 = vadd.xlane.f32.xlu0 %v1389
        %v1391 = vpop.xlane.xlu0 %1390
        %v1392 = vsel %vm1234, %v1354, 0.0
        %1393 = vadd.xlane.f32.xlu0 %v1392
        %v1394 = vpop.xlane.xlu0 %1393
        %v1395 = vadd.f32 %v1363, %v1373
        %v1396 = vadd.f32 %v1364, %v1376
        %v1397 = vadd.f32 %v1365, %v1379
        %v1398 = vadd.f32 %v1366, %v1382
        %v1399 = vadd.f32 %v1367, %v1385
        %v1400 = vadd.f32 %v1368, %v1388
        %v1401 = vadd.f32 %v1369, %v1391
        %v1402 = vadd.f32 %v1370, %v1394
        %vm1403 = vcmask 7168
        %1404 = vst.msk [vmem:[#allocation4] sm:$0xff] %vm1403, %v1395
        %1405 = vst.msk [vmem:[#allocation4 + $0x8] sm:$0xff] %vm1403, %v1396
        %1406 = vst.msk [vmem:[#allocation4 + $0x10] sm:$0xff] %vm1403, %v1397
        %1407 = vst.msk [vmem:[#allocation4 + $0x18] sm:$0xff] %vm1403, %v1398
        %1408 = vst.msk [vmem:[#allocation4 + $0x20] sm:$0xff] %vm1403, %v1399
        %1409 = vst.msk [vmem:[#allocation4 + $0x28] sm:$0xff] %vm1403, %v1400
        %1410 = vst.msk [vmem:[#allocation4 + $0x30] sm:$0xff] %vm1403, %v1401
        %1411 = vst.msk [vmem:[#allocation4 + $0x38] sm:$0xff] %vm1403, %v1402
        %v1412 = vld [vmem:[#allocation5] sm:$0xff]
        %v1413 = vld [vmem:[#allocation5 + $0x8] sm:$0xff]
        %v1414 = vld [vmem:[#allocation5 + $0x10] sm:$0xff]
        %v1415 = vld [vmem:[#allocation5 + $0x18] sm:$0xff]
        %v1416 = vld [vmem:[#allocation5 + $0x20] sm:$0xff]
        %v1417 = vld [vmem:[#allocation5 + $0x28] sm:$0xff]
        %v1418 = vld [vmem:[#allocation5 + $0x30] sm:$0xff]
        %v1419 = vld [vmem:[#allocation5 + $0x38] sm:$0xff]
        %1421 = vset.pattern.permute.xlu0 0
        %1422 = vperm.xlu0 %1421, %v1276
        %v1423 = vpop.permute.xlu0 %1422
        %1426 = vset.pattern.permute.xlu0 0
        %1427 = vperm.xlu0 %1426, %v1278
        %v1428 = vpop.permute.xlu0 %1427
        %1431 = vset.pattern.permute.xlu0 0
        %1432 = vperm.xlu0 %1431, %v1280
        %v1433 = vpop.permute.xlu0 %1432
        %1436 = vset.pattern.permute.xlu0 0
        %1437 = vperm.xlu0 %1436, %v1282
        %v1438 = vpop.permute.xlu0 %1437
        %1441 = vset.pattern.permute.xlu0 0
        %1442 = vperm.xlu0 %1441, %v1284
        %v1443 = vpop.permute.xlu0 %1442
        %1446 = vset.pattern.permute.xlu0 0
        %1447 = vperm.xlu0 %1446, %v1286
        %v1448 = vpop.permute.xlu0 %1447
        %1451 = vset.pattern.permute.xlu0 0
        %1452 = vperm.xlu0 %1451, %v1288
        %v1453 = vpop.permute.xlu0 %1452
        %1456 = vset.pattern.permute.xlu0 0
        %1457 = vperm.xlu0 %1456, %v1290
        %v1458 = vpop.permute.xlu0 %1457
        %v1460 = vmul.f32 %v1423, %v1412
        %v1461 = vmul.f32 %v1428, %v1413
        %v1462 = vmul.f32 %v1433, %v1414
        %v1463 = vmul.f32 %v1438, %v1415
        %v1464 = vmul.f32 %v1443, %v1416
        %v1465 = vmul.f32 %v1448, %v1417
        %v1466 = vmul.f32 %v1453, %v1418
        %v1467 = vmul.f32 %v1458, %v1419
        %v1469 = vsel %vm1234, %v1340, 0
        %v1472 = vsel %vm1234, %v1342, 0
        %v1475 = vsel %vm1234, %v1344, 0
        %v1478 = vsel %vm1234, %v1346, 0
        %v1481 = vsel %vm1234, %v1348, 0
        %v1484 = vsel %vm1234, %v1350, 0
        %v1487 = vsel %vm1234, %v1352, 0
        %v1490 = vsel %vm1234, %v1354, 0
        %1492 = vmatprep.subr.mxu0 0.0
        %1493 = vmatpush1.msra.mxu0 %v1075
        %1494 = vmatprep.subr.mxu0 0.0
        %1495 = vmatpush1.msra.mxu0 %v1080
        %1496 = vmatprep.subr.mxu0 0.0
        %1497 = vmatpush1.msra.mxu0 %v1085
        %1498 = vmatprep.subr.mxu0 0.0
        %1499 = vmatpush1.msra.mxu0 %v1090
        %1500 = vmatprep.subr.mxu0 0.0
        %1501 = vmatpush1.msra.mxu0 %v1095
        %1502 = vmatprep.subr.mxu0 0.0
        %1503 = vmatpush1.msra.mxu0 %v1100
        %1504 = vmatprep.subr.mxu0 0.0
        %1505 = vmatpush1.msra.mxu0 %v1105
        %1506 = vmatprep.subr.mxu0 0.0
        %1507 = vmatpush1.msra.mxu0 %v1110
        %1508 = vmatprep.subr.mxu0 0.0
        %1509 = vmatpush1.msra.mxu0 0.0
        %1510 = vmatprep.subr.mxu0 0.0
        %1511 = vmatpush1.msra.mxu0 0.0
        %1512 = vmatprep.subr.mxu0 0.0
        %1513 = vmatpush1.msra.mxu0 0.0
        %1514 = vmatprep.subr.mxu0 0.0
        %1515 = vmatpush1.msra.mxu0 0.0
        %1516 = vmatprep.subr.mxu0 0.0
        %1517 = vmatpush1.msra.mxu0 0.0
        %1518 = vmatprep.subr.mxu0 0.0
        %1519 = vmatpush1.msra.mxu0 0.0
        %1520 = vmatprep.subr.mxu0 0.0
        %1521 = vmatpush1.msra.mxu0 0.0
        %1522 = vmatprep.subr.mxu0 0.0
        %1523 = vmatpush1.msra.mxu0 0.0
        %1524 = vmatprep.subr.mxu0 0.0
        %1525 = vmatpush1.msra.mxu0 0.0
        %1526 = vmatprep.subr.mxu0 0.0
        %1527 = vmatpush1.msra.mxu0 0.0
        %1528 = vmatprep.subr.mxu0 0.0
        %1529 = vmatpush1.msra.mxu0 0.0
        %1530 = vmatprep.subr.mxu0 0.0
        %1531 = vmatpush1.msra.mxu0 0.0
        %1532 = vmatprep.subr.mxu0 0.0
        %1533 = vmatpush1.msra.mxu0 0.0
        %1534 = vmatprep.subr.mxu0 0.0
        %1535 = vmatpush1.msra.mxu0 0.0
        %1536 = vmatprep.subr.mxu0 0.0
        %1537 = vmatpush1.msra.mxu0 0.0
        %1538 = vmatprep.subr.mxu0 0.0
        %1539 = vmatpush1.msra.mxu0 0.0
        %1540 = vmatprep.subr.mxu0 0.0
        %1541 = vmatpush1.msra.mxu0 0.0
        %1542 = vmatprep.subr.mxu0 0.0
        %1543 = vmatpush1.msra.mxu0 0.0
        %1544 = vmatprep.subr.mxu0 0.0
        %1545 = vmatpush1.msra.mxu0 0.0
        %1546 = vmatprep.subr.mxu0 0.0
        %1547 = vmatpush1.msra.mxu0 0.0
        %1548 = vmatprep.subr.mxu0 0.0
        %1549 = vmatpush1.msra.mxu0 0.0
        %1550 = vmatprep.subr.mxu0 0.0
        %1551 = vmatpush1.msra.mxu0 0.0
        %1552 = vmatprep.subr.mxu0 0.0
        %1553 = vmatpush1.msra.mxu0 0.0
        %1554 = vmatprep.subr.mxu0 0.0
        %1555 = vmatpush1.msra.mxu0 0.0
        %1556 = vmatprep.mubr.f32.mxu0 0.0
        %1557 = vmatmul.mubr.f32.gmra.mrb[0].mxu0 %v1469
        %v1558 = vpop.f32.mrb[0].mxu0
        %v1559 = vadd.f32 0.0, %v1558
        %v1560 = vpop.f32.mrb[0].mxu0
        %1561 = vmatprep.mubr.f32.mxu0 0.0
        %1562 = vmatmul.mubr.f32.gmra.mrb[0].mxu0 %v1472
        %v1563 = vpop.f32.mrb[0].mxu0
        %v1564 = vadd.f32 0.0, %v1563
        %v1565 = vpop.f32.mrb[0].mxu0
        %1566 = vmatprep.mubr.f32.mxu0 0.0
        %1567 = vmatmul.mubr.f32.gmra.mrb[0].mxu0 %v1475
        %v1568 = vpop.f32.mrb[0].mxu0
        %v1569 = vadd.f32 0.0, %v1568
        %v1570 = vpop.f32.mrb[0].mxu0
        %1571 = vmatprep.mubr.f32.mxu0 0.0
        %1572 = vmatmul.mubr.f32.gmra.mrb[0].mxu0 %v1478
        %v1573 = vpop.f32.mrb[0].mxu0
        %v1574 = vadd.f32 0.0, %v1573
        %v1575 = vpop.f32.mrb[0].mxu0
        %1576 = vmatprep.mubr.f32.mxu0 0.0
        %1577 = vmatmul.mubr.f32.gmra.mrb[0].mxu0 %v1481
        %v1578 = vpop.f32.mrb[0].mxu0
        %v1579 = vadd.f32 0.0, %v1578
        %v1580 = vpop.f32.mrb[0].mxu0
        %1581 = vmatprep.mubr.f32.mxu0 0.0
        %1582 = vmatmul.mubr.f32.gmra.mrb[0].mxu0 %v1484
        %v1583 = vpop.f32.mrb[0].mxu0
        %v1584 = vadd.f32 0.0, %v1583
        %v1585 = vpop.f32.mrb[0].mxu0
        %1586 = vmatprep.mubr.f32.mxu0 0.0
        %1587 = vmatmul.mubr.f32.gmra.mrb[0].mxu0 %v1487
        %v1588 = vpop.f32.mrb[0].mxu0
        %v1589 = vadd.f32 0.0, %v1588
        %v1590 = vpop.f32.mrb[0].mxu0
        %1591 = vmatprep.mubr.f32.mxu0 0.0
        %1592 = vmatmul.mubr.f32.gmra.mrb[0].mxu0 %v1490
        %v1593 = vpop.f32.mrb[0].mxu0
        %v1594 = vadd.f32 0.0, %v1593
        %v1595 = vpop.f32.mrb[0].mxu0
        %1596 = vdwg.mxu0
        %v1597 = vadd.f32 %v1460, %v1559
        %v1598 = vadd.f32 %v1461, %v1564
        %v1599 = vadd.f32 %v1462, %v1569
        %v1600 = vadd.f32 %v1463, %v1574
        %v1601 = vadd.f32 %v1464, %v1579
        %v1602 = vadd.f32 %v1465, %v1584
        %v1603 = vadd.f32 %v1466, %v1589
        %v1604 = vadd.f32 %v1467, %v1594
        %1605 = vst [vmem:[#allocation5] sm:$0xff] %v1597
        %1606 = vst [vmem:[#allocation5 + $0x8] sm:$0xff] %v1598
        %1607 = vst [vmem:[#allocation5 + $0x10] sm:$0xff] %v1599
        %1608 = vst [vmem:[#allocation5 + $0x18] sm:$0xff] %v1600
        %1609 = vst [vmem:[#allocation5 + $0x20] sm:$0xff] %v1601
        %1610 = vst [vmem:[#allocation5 + $0x28] sm:$0xff] %v1602
        %1611 = vst [vmem:[#allocation5 + $0x30] sm:$0xff] %v1603
        %1612 = vst [vmem:[#allocation5 + $0x38] sm:$0xff] %v1604
        %1613 = vst.msk [vmem:[#allocation3] sm:$0xff] %vm1403, %v1259
        %1614 = vst.msk [vmem:[#allocation3 + $0x8] sm:$0xff] %vm1403, %v1260
        %1615 = vst.msk [vmem:[#allocation3 + $0x10] sm:$0xff] %vm1403, %v1261
        %1616 = vst.msk [vmem:[#allocation3 + $0x18] sm:$0xff] %vm1403, %v1262
        %1617 = vst.msk [vmem:[#allocation3 + $0x20] sm:$0xff] %vm1403, %v1263
        %1618 = vst.msk [vmem:[#allocation3 + $0x28] sm:$0xff] %vm1403, %v1264
        %1619 = vst.msk [vmem:[#allocation3 + $0x30] sm:$0xff] %vm1403, %v1265
        %1620 = vst.msk [vmem:[#allocation3 + $0x38] sm:$0xff] %vm1403, %v1266
        %p1621 = scmp.eq.s32.totalorder %s30, 1
        // Predicated region
        $region61: #{tpu_custom_call.1} parent=55 // pred_check
          %p1622 = pneg %p1621
        $region62: #{tpu_custom_call.1} parent=55 // pred_check_branch
          %1624 = sbr.rel (%p1622) target = $region64
        $region63: #{tpu_custom_call.1} parent=55 // pred_region
          %v1625 = vld [vmem:[#allocation5] sm:$0xff]
          %v1626 = vld [vmem:[#allocation5 + $0x8] sm:$0xff]
          %v1627 = vld [vmem:[#allocation5 + $0x10] sm:$0xff]
          %v1628 = vld [vmem:[#allocation5 + $0x18] sm:$0xff]
          %v1629 = vld [vmem:[#allocation5 + $0x20] sm:$0xff]
          %v1630 = vld [vmem:[#allocation5 + $0x28] sm:$0xff]
          %v1631 = vld [vmem:[#allocation5 + $0x30] sm:$0xff]
          %v1632 = vld [vmem:[#allocation5 + $0x38] sm:$0xff]
          %v1633 = vld [vmem:[#allocation4] sm:$0xff]
          %v1634 = vld [vmem:[#allocation4 + $0x8] sm:$0xff]
          %v1635 = vld [vmem:[#allocation4 + $0x10] sm:$0xff]
          %v1636 = vld [vmem:[#allocation4 + $0x18] sm:$0xff]
          %v1637 = vld [vmem:[#allocation4 + $0x20] sm:$0xff]
          %v1638 = vld [vmem:[#allocation4 + $0x28] sm:$0xff]
          %v1639 = vld [vmem:[#allocation4 + $0x30] sm:$0xff]
          %v1640 = vld [vmem:[#allocation4 + $0x38] sm:$0xff]
          %v1641 = vrcp.pop %v1633
          %v1642 = vrcp.pop %v1634
          %v1643 = vrcp.pop %v1635
          %v1644 = vrcp.pop %v1636
          %v1645 = vrcp.pop %v1637
          %v1646 = vrcp.pop %v1638
          %v1647 = vrcp.pop %v1639
          %v1648 = vrcp.pop %v1640
          %1650 = vset.pattern.permute.xlu0 0
          %1651 = vperm.xlu0 %1650, %v1641
          %v1652 = vpop.permute.xlu0 %1651
          %1655 = vset.pattern.permute.xlu0 0
          %1656 = vperm.xlu0 %1655, %v1642
          %v1657 = vpop.permute.xlu0 %1656
          %1660 = vset.pattern.permute.xlu0 0
          %1661 = vperm.xlu0 %1660, %v1643
          %v1662 = vpop.permute.xlu0 %1661
          %1665 = vset.pattern.permute.xlu0 0
          %1666 = vperm.xlu0 %1665, %v1644
          %v1667 = vpop.permute.xlu0 %1666
          %1670 = vset.pattern.permute.xlu0 0
          %1671 = vperm.xlu0 %1670, %v1645
          %v1672 = vpop.permute.xlu0 %1671
          %1675 = vset.pattern.permute.xlu0 0
          %1676 = vperm.xlu0 %1675, %v1646
          %v1677 = vpop.permute.xlu0 %1676
          %1680 = vset.pattern.permute.xlu0 0
          %1681 = vperm.xlu0 %1680, %v1647
          %v1682 = vpop.permute.xlu0 %1681
          %1685 = vset.pattern.permute.xlu0 0
          %1686 = vperm.xlu0 %1685, %v1648
          %v1687 = vpop.permute.xlu0 %1686
          %v1689 = vmul.f32 %v1625, %v1652
          %v1690 = vmul.f32 %v1626, %v1657
          %v1691 = vmul.f32 %v1627, %v1662
          %v1692 = vmul.f32 %v1628, %v1667
          %v1693 = vmul.f32 %v1629, %v1672
          %v1694 = vmul.f32 %v1630, %v1677
          %v1695 = vmul.f32 %v1631, %v1682
          %v1696 = vmul.f32 %v1632, %v1687
          %v1697 = vld [vmem:[%s7] sm:$0xff]
          %v1698 = vld [vmem:[%s7 + $0x8] sm:$0xff]
          %v1699 = vld [vmem:[%s7 + $0x10] sm:$0xff]
          %v1700 = vld [vmem:[%s7 + $0x18] sm:$0xff]
          %v1701 = vld [vmem:[%s7 + $0x20] sm:$0xff]
          %v1702 = vld [vmem:[%s7 + $0x28] sm:$0xff]
          %v1703 = vld [vmem:[%s7 + $0x30] sm:$0xff]
          %v1704 = vld [vmem:[%s7 + $0x38] sm:$0xff]
          %v1705 = vld [vmem:[%s7 + $0x40] sm:$0xff]
          %v1706 = vld [vmem:[%s7 + $0x48] sm:$0xff]
          %v1707 = vld [vmem:[%s7 + $0x50] sm:$0xff]
          %v1708 = vld [vmem:[%s7 + $0x58] sm:$0xff]
          %v1709 = vld [vmem:[%s7 + $0x60] sm:$0xff]
          %v1710 = vld [vmem:[%s7 + $0x68] sm:$0xff]
          %v1711 = vld [vmem:[%s7 + $0x70] sm:$0xff]
          %v1712 = vld [vmem:[%s7 + $0x78] sm:$0xff]
          %v1713 = vld [vmem:[%s8] sm:$0x1]
          %v1715 = vlaneseq
          %v1716 = vshrl.u32 %v1715, 7
          %v1717 = vsub.s32 0, %v1716
          %v1718 = vrot.slane %v1713, %v1717
          %1720 = vmatprep.subr.mxu0 0.0
          %1721 = vmatpush1.msra.mxu0 %v1697
          %1722 = vmatprep.subr.mxu0 0.0
          %1723 = vmatpush1.msra.mxu0 %v1698
          %1724 = vmatprep.subr.mxu0 0.0
          %1725 = vmatpush1.msra.mxu0 %v1699
          %1726 = vmatprep.subr.mxu0 0.0
          %1727 = vmatpush1.msra.mxu0 %v1700
          %1728 = vmatprep.subr.mxu0 0.0
          %1729 = vmatpush1.msra.mxu0 %v1701
          %1730 = vmatprep.subr.mxu0 0.0
          %1731 = vmatpush1.msra.mxu0 %v1702
          %1732 = vmatprep.subr.mxu0 0.0
          %1733 = vmatpush1.msra.mxu0 %v1703
          %1734 = vmatprep.subr.mxu0 0.0
          %1735 = vmatpush1.msra.mxu0 %v1704
          %1736 = vmatprep.subr.mxu0 0.0
          %1737 = vmatpush1.msra.mxu0 %v1705
          %1738 = vmatprep.subr.mxu0 0.0
          %1739 = vmatpush1.msra.mxu0 %v1706
          %1740 = vmatprep.subr.mxu0 0.0
          %1741 = vmatpush1.msra.mxu0 %v1707
          %1742 = vmatprep.subr.mxu0 0.0
          %1743 = vmatpush1.msra.mxu0 %v1708
          %1744 = vmatprep.subr.mxu0 0.0
          %1745 = vmatpush1.msra.mxu0 %v1709
          %1746 = vmatprep.subr.mxu0 0.0
          %1747 = vmatpush1.msra.mxu0 %v1710
          %1748 = vmatprep.subr.mxu0 0.0
          %1749 = vmatpush1.msra.mxu0 %v1711
          %1750 = vmatprep.subr.mxu0 0.0
          %1751 = vmatpush1.msra.mxu0 %v1712
          %1752 = vmatprep.subr.mxu0 0.0
          %1753 = vmatpush1.msra.mxu0 0.0
          %1754 = vmatprep.subr.mxu0 0.0
          %1755 = vmatpush1.msra.mxu0 0.0
          %1756 = vmatprep.subr.mxu0 0.0
          %1757 = vmatpush1.msra.mxu0 0.0
          %1758 = vmatprep.subr.mxu0 0.0
          %1759 = vmatpush1.msra.mxu0 0.0
          %1760 = vmatprep.subr.mxu0 0.0
          %1761 = vmatpush1.msra.mxu0 0.0
          %1762 = vmatprep.subr.mxu0 0.0
          %1763 = vmatpush1.msra.mxu0 0.0
          %1764 = vmatprep.subr.mxu0 0.0
          %1765 = vmatpush1.msra.mxu0 0.0
          %1766 = vmatprep.subr.mxu0 0.0
          %1767 = vmatpush1.msra.mxu0 0.0
          %1768 = vmatprep.subr.mxu0 0.0
          %1769 = vmatpush1.msra.mxu0 0.0
          %1770 = vmatprep.subr.mxu0 0.0
          %1771 = vmatpush1.msra.mxu0 0.0
          %1772 = vmatprep.subr.mxu0 0.0
          %1773 = vmatpush1.msra.mxu0 0.0
          %1774 = vmatprep.subr.mxu0 0.0
          %1775 = vmatpush1.msra.mxu0 0.0
          %1776 = vmatprep.subr.mxu0 0.0
          %1777 = vmatpush1.msra.mxu0 0.0
          %1778 = vmatprep.subr.mxu0 0.0
          %1779 = vmatpush1.msra.mxu0 0.0
          %1780 = vmatprep.subr.mxu0 0.0
          %1781 = vmatpush1.msra.mxu0 0.0
          %1782 = vmatprep.subr.mxu0 0.0
          %1783 = vmatpush1.msra.mxu0 0.0
          %1784 = vmatprep.mubr.f32.mxu0 0.0
          %1785 = vmatmul.mubr.f32.gmra.mrb[0].mxu0 %v1689
          %v1786 = vpop.f32.mrb[0].mxu0
          %v1787 = vadd.f32 %v1718, %v1786
          %v1788 = vpop.f32.mrb[0].mxu0
          %1789 = vmatprep.mubr.f32.mxu0 0.0
          %1790 = vmatmul.mubr.f32.gmra.mrb[0].mxu0 %v1690
          %v1791 = vpop.f32.mrb[0].mxu0
          %v1792 = vadd.f32 %v1718, %v1791
          %v1793 = vpop.f32.mrb[0].mxu0
          %1794 = vmatprep.mubr.f32.mxu0 0.0
          %1795 = vmatmul.mubr.f32.gmra.mrb[0].mxu0 %v1691
          %v1796 = vpop.f32.mrb[0].mxu0
          %v1797 = vadd.f32 %v1718, %v1796
          %v1798 = vpop.f32.mrb[0].mxu0
          %1799 = vmatprep.mubr.f32.mxu0 0.0
          %1800 = vmatmul.mubr.f32.gmra.mrb[0].mxu0 %v1692
          %v1801 = vpop.f32.mrb[0].mxu0
          %v1802 = vadd.f32 %v1718, %v1801
          %v1803 = vpop.f32.mrb[0].mxu0
          %1804 = vmatprep.mubr.f32.mxu0 0.0
          %1805 = vmatmul.mubr.f32.gmra.mrb[0].mxu0 %v1693
          %v1806 = vpop.f32.mrb[0].mxu0
          %v1807 = vadd.f32 %v1718, %v1806
          %v1808 = vpop.f32.mrb[0].mxu0
          %1809 = vmatprep.mubr.f32.mxu0 0.0
          %1810 = vmatmul.mubr.f32.gmra.mrb[0].mxu0 %v1694
          %v1811 = vpop.f32.mrb[0].mxu0
          %v1812 = vadd.f32 %v1718, %v1811
          %v1813 = vpop.f32.mrb[0].mxu0
          %1814 = vmatprep.mubr.f32.mxu0 0.0
          %1815 = vmatmul.mubr.f32.gmra.mrb[0].mxu0 %v1695
          %v1816 = vpop.f32.mrb[0].mxu0
          %v1817 = vadd.f32 %v1718, %v1816
          %v1818 = vpop.f32.mrb[0].mxu0
          %1819 = vmatprep.mubr.f32.mxu0 0.0
          %1820 = vmatmul.mubr.f32.gmra.mrb[0].mxu0 %v1696
          %v1821 = vpop.f32.mrb[0].mxu0
          %v1822 = vadd.f32 %v1718, %v1821
          %v1823 = vpop.f32.mrb[0].mxu0
          %1824 = vdwg.mxu0
          %1825 = vst [vmem:[%s383] sm:$0xff] %v1787
          %1826 = vst [vmem:[%s383 + $0x8] sm:$0xff] %v1792
          %1827 = vst [vmem:[%s383 + $0x10] sm:$0xff] %v1797
          %1828 = vst [vmem:[%s383 + $0x18] sm:$0xff] %v1802
          %1829 = vst [vmem:[%s383 + $0x20] sm:$0xff] %v1807
          %1830 = vst [vmem:[%s383 + $0x28] sm:$0xff] %v1812
          %1831 = vst [vmem:[%s383 + $0x30] sm:$0xff] %v1817
          %1832 = vst [vmem:[%s383 + $0x38] sm:$0xff] %v1822
        $region64: #{tpu_custom_call.1} parent=55 // pred_fallthru
          _
        %s1833 = sand.u32 %s255, 1
        %s1834 = scalar_lea.sflag [#allocation7], %s1833
        %s1835 = sand.u32 %s255, 1
        %s1836 = smul.addr %s1835, 64
        %s1837 = scalar_lea.vmem [#allocation6], %s1836
        // Predicated region
        $region65: #{tpu_custom_call.1} parent=55 // pred_check
          %p1838 = pneg %p265
        $region66: #{tpu_custom_call.1} parent=55 // pred_check_branch
          %1840 = sbr.rel (%p1838) target = $region68
        $region67: #{tpu_custom_call.1} parent=55 // pred_region
          %s1841 = smul.u32 8, %s29
          %s1843 = ssub.s32 1024, 1024
          %1844 = vsyncadd %s1834, %s1843
          %s1845 = smul.addr %s28, 16
          %s1846 = sadd.s32 %s1841, %s1845
          %s1847 = smul.addr %s1846, 128
          %s1848 = scalar_lea.hbm %s9, %s1847
          %s1849 = sshll.u32 %s1837, 4
          %s1850 = int_to_ptr.vmem [resolvable:$true] %s1849
          %1855 = dma.vmem_to_hbm [thread:$0]  %s1850, 1024, %s1848, %s1834, 128, 128, 8
        $region68: #{tpu_custom_call.1} parent=55 // pred_fallthru
          _
      $region56: #{tpu_custom_call.1} parent=5 // pred_fallthru
        _
      %p1856 = scmp.le.s32.totalorder 2, %s18
      // Predicated region
      $region69: #{tpu_custom_call.1} parent=5 // pred_check
        %p1857 = pneg %p1856
      $region70: #{tpu_custom_call.1} parent=5 // pred_check_branch
        %1859 = sbr.rel (%p1857) target = $region72
      $region71: #{tpu_custom_call.1} parent=5 // pred_region
        %s1860 = ssub.s32 %s18, 2
        // Predicated region
        $region73: #{tpu_custom_call.1} parent=71 // pred_check
          %p1861 = pneg %p271
        $region74: #{tpu_custom_call.1} parent=71 // pred_check_branch
          %1863 = sbr.rel (%p1861) target = $region76
        $region75: #{tpu_custom_call.1} parent=71 // pred_region
          %s1864 = sand.u32 %s256, 1
          %s1865 = scalar_lea.sflag [#allocation7], %s1864
          %s1866 = sand.u32 %s256, 1
          %s1867 = smul.addr %s1866, 64
          %s1868 = scalar_lea.vmem [#allocation6], %s1867
          %1869 = dma.done %s1865, 1024
        $region76: #{tpu_custom_call.1} parent=71 // pred_fallthru
          _
      $region72: #{tpu_custom_call.1} parent=5 // pred_fallthru
        _
    $region6: #{tpu_custom_call.1} parent=1 // loop_footer
      %s22 = sadd.s32 1, %s18
    $region7: #{tpu_custom_call.1} parent=1 // loop_footer_branch
      %17 = sbr.rel target = $region3
    $region8: #{tpu_custom_call.1} parent=1 // loop_exit
      _
    %1870 = vsyncpa [#allocation7], 1
    %s1871 = scalar_lea.sflag [#allocation7], 1
    %1872 = vsyncpa %s1871, 1

</llo_original>
